<compile_context>
chip_gen: v7x
topology: tpu7x:2x2x1
jax: 0.10.0
libtpu: 0.0.40
codegen_flags: <defaults>
</compile_context>

<pallas_src>
import functools

import jax
import jax.numpy as jnp
from jax.experimental import pallas as pl
from jax.experimental.pallas import tpu as pltpu

LANE = 128     # vreg lane width: feature axis AND node axis padded to multiples of this
SUBLANE = 8


def _round_up(v, m):
    return ((v + m - 1) // m) * m


# ----------------------------------------------------------------------------------
# Kernel: one SAGEConv layer, tiled over (node row-block i, aggregation K-slab k).
#   acc[:, :Hp]  += counts[i, k] @ x[k]            (f32 accumulation on the MXU)
#   acc[:, Hp:]   = x[i]                           (written once at k == 0)
#   epilogue:      acc[:, :Hp] *= 1/deg[i]         (mean, exact f32 scale)
#                  out[i] = acc @ [Wl^T; Wr^T] + b (single fused 2*Hp-deep MXU dot)
# ----------------------------------------------------------------------------------
def _sage_layer_kernel(a_ref, xk_ref, xi_ref, inv_ref, w_ref, b_ref, o_ref, acc_ref,
                       *, apply_relu):
    k = pl.program_id(1)
    hp = xi_ref.shape[-1]          # padded input feature width (multiple of 128)
    tm = acc_ref.shape[0]

    @pl.when(k == 0)
    def _():
        acc_ref[:, :hp] = jnp.zeros((tm, hp), jnp.float32)
        acc_ref[:, hp:] = xi_ref[...]          # self features, fetched once per row block

    # Neighbor-sum accumulation for this K-slab. A holds exact edge counts in bf16
    # (halves HBM traffic of the O(N^2) operand); upcast to f32 for exact accumulation.
    acc_ref[:, :hp] += jnp.dot(a_ref[...].astype(jnp.float32), xk_ref[...],
                               preferred_element_type=jnp.float32)

    @pl.when(k == pl.num_programs(1) - 1)
    def _():
        # Mean = sum * (1/deg), applied once in f32 (counts were exact, so no
        # precision loss from the bf16 adjacency stream).
        acc_ref[:, :hp] = acc_ref[:, :hp] * inv_ref[...]
        # Fused feature transform: one MXU dot with 2*Hp contraction depth
        # ([mean_agg | x_self] @ [Wl^T; Wr^T]) — no concatenate, no extra copy.
        out = jnp.dot(acc_ref[...], w_ref[...],
                      preferred_element_type=jnp.float32) + b_ref[...]
        if apply_relu:
            out = jnp.maximum(out, 0.0)
        o_ref[...] = out.astype(o_ref.dtype)


def _sage_layer(a_counts, x_pad, inv_deg, w_stacked, b_pad, *, apply_relu,
                tm=256, tk=256):
    """One SAGEConv layer on lane-dense, padded operands.

    a_counts:  [Np, Np]  bf16 edge counts (exact small integers), zero-padded
    x_pad:     [Np, Hp_in]  f32
    inv_deg:   [Np, 1]   f32 reciprocal in-degree (1 for isolated / padded rows)
    w_stacked: [2*Hp_in, Hp_out] = vstack(Wl^T, Wr^T), zero-padded
    b_pad:     [1, Hp_out]
    """
    np_, hp_in = x_pad.shape
    hp_out = w_stacked.shape[1]

    # Row tile: large (256 default) for MXU utilisation; Np is always a multiple of
    # LANE so falling back to LANE always divides evenly.
    tm = min(tm, np_)
    if np_ % tm:
        tm = LANE
    # Keep at least two row blocks when possible so v7x's two TensorCores both work.
    if np_ // tm < 2 and np_ >= 2 * LANE:
        tm = np_ // 2 if (np_ // 2) % LANE == 0 else LANE

    # K-slab width of the adjacency: always a lane-aligned 128/256-wide slab
    # (nodes are padded to LANE in the wrapper, so no full-width fallback).
    tk = min(tk, np_)
    if np_ % tk:
        tk = LANE

    grid = (np_ // tm, np_ // tk)
    kernel = functools.partial(_sage_layer_kernel, apply_relu=apply_relu)

    # VMEM footprint at tm=tk=256, Hp=128: A bf16 128KB + xk/xi/out f32 128KB each
    # (double-buffered) + weights 128KB + scratch 256KB  ~= 1.5 MiB — well inside the
    # scoped default on every generation, so no vmem_limit_bytes override needed.
    return pl.pallas_call(
        kernel,
        out_shape=jax.ShapeDtypeStruct((np_, hp_out), jnp.float32),
        grid_spec=pltpu.PrefetchScalarGridSpec(
            num_scalar_prefetch=0,
            grid=grid,
            in_specs=[
                pl.BlockSpec((tm, tk), lambda i, k: (i, k)),             # A counts (bf16)
                pl.BlockSpec((tk, hp_in), lambda i, k: (k, 0)),          # neighbor features
                pl.BlockSpec((tm, hp_in), lambda i, k: (i, 0)),          # self features
                pl.BlockSpec((tm, 1), lambda i, k: (i, 0)),              # 1/deg
                pl.BlockSpec((2 * hp_in, hp_out), lambda i, k: (0, 0)),  # stacked weights
                pl.BlockSpec((1, hp_out), lambda i, k: (0, 0)),          # bias
            ],
            out_specs=pl.BlockSpec((tm, hp_out), lambda i, k: (i, 0)),
            scratch_shapes=[pltpu.VMEM((tm, 2 * hp_in), jnp.float32)],   # [agg | x_self]
        ),
        compiler_params=pltpu.CompilerParams(
            dimension_semantics=("parallel", "arbitrary")),
    )(a_counts, x_pad, x_pad, inv_deg, w_stacked, b_pad)


# ----------------------------------------------------------------------------------
# One-time (out of the hot path) graph / parameter preparation.
# ----------------------------------------------------------------------------------
def prepare_graph(edge_index, num_nodes):
    """Build the padded dense edge-count matrix (bf16, exact) and f32 1/deg once.

    counts[i, j] = #edges j->i (PyG 'source_to_target'); duplicate edges counted,
    matching scatter-mean. Built directly into the LANE-padded buffer. Counts are
    small integers -> exactly representable in bf16 (up to 256 duplicates per pair).
    """
    np_ = _round_up(num_nodes, LANE)
    src, dst = edge_index[0], edge_index[1]
    counts = jnp.zeros((np_, np_), jnp.float32).at[dst, src].add(1.0)
    deg = counts.sum(axis=1, keepdims=True)                       # [Np, 1]
    inv_deg = 1.0 / jnp.maximum(deg, 1.0)                         # mean of empty = 0
    return counts.astype(jnp.bfloat16), inv_deg


def prepare_params(params):
    """Transpose PyTorch [out,in] weights, stack Wl/Wr for the fused matmul, and
    zero-pad everything to lane-dense (multiple-of-128) widths. Done once."""
    def prep_layer(wl, wr, bl):
        out_c, in_c = wl.shape
        in_p = _round_up(in_c, LANE)
        out_p = _round_up(out_c, LANE)
        wl_t = jnp.zeros((in_p, out_p), jnp.float32).at[:in_c, :out_c].set(wl.T)
        wr_t = jnp.zeros((in_p, out_p), jnp.float32).at[:in_c, :out_c].set(wr.T)
        w_stacked = jnp.concatenate([wl_t, wr_t], axis=0)         # [2*in_p, out_p]
        b = jnp.zeros((1, out_p), jnp.float32).at[0, :out_c].set(bl)
        return w_stacked, b, in_c, out_c

    w1, b1, in1, _hid = prep_layer(params["wl1"], params["wr1"], params["bl1"])
    w2, b2, _in2, out_c = prep_layer(params["wl2"], params["wr2"], params["bl2"])
    weights = {"w1": w1, "b1": b1, "w2": w2, "b2": b2}
    meta = {"in_channels": in1, "out_channels": out_c}
    return weights, meta


@functools.partial(jax.jit, static_argnames=("in_channels", "out_channels"))
def gs_forward(x, a_counts, inv_deg, w1, b1, w2, b2, *, in_channels, out_channels):
    """x: [N, H] f32 node features; a_counts/inv_deg from prepare_graph (padded)."""
    n = x.shape[0]
    np_ = a_counts.shape[0]
    hp_in = w1.shape[0] // 2

    x_pad = jnp.zeros((np_, hp_in), jnp.float32).at[:n, :in_channels].set(x)

    h = _sage_layer(a_counts, x_pad, inv_deg, w1, b1, apply_relu=True)   # [Np, Hp]
    out = _sage_layer(a_counts, h, inv_deg, w2, b2, apply_relu=False)    # [Np, Hp]
    return out[:n, :out_channels]


def gs_reference(x, edge_index, params):
    """Plain-JAX reference matching PyG SAGEConv semantics (unpadded, f32)."""
    n = x.shape[0]
    src, dst = edge_index[0], edge_index[1]
    adj = jnp.zeros((n, n), jnp.float32).at[dst, src].add(1.0)
    deg = adj.sum(axis=1, keepdims=True)
    a = adj / jnp.maximum(deg, 1.0)

    def sage(x_in, wl, wr, bl):
        return (a @ x_in) @ wl.T + bl + x_in @ wr.T

    h1 = jax.nn.relu(sage(x, params["wl1"], params["wr1"], params["bl1"]))
    return sage(h1, params["wl2"], params["wr2"], params["bl2"])


if __name__ == "__main__":
    # Small but non-trivial: N=300 -> Np=384 exercises node padding, multiple row
    # blocks (parallel axis) and multiple K-slabs (accumulator init/finalize).
    N, H, E = 300, 32, 1200  # nodes, hidden_channels, edges

    key = jax.random.PRNGKey(0)
    kx, ke1, ke2, k1, k2, k3, k4, k5, k6 = jax.random.split(key, 9)

    x = jax.random.normal(kx, (N, H), jnp.float32)
    src = jax.random.randint(ke1, (E,), 0, N, jnp.int32)
    dst = jax.random.randint(ke2, (E,), 0, N, jnp.int32)
    edge_index = jnp.stack([src, dst], axis=0)

    # Deterministic parameter init (Glorot-ish scale), PyTorch layout [out, in].
    scale = 1.0 / jnp.sqrt(jnp.float32(H))
    params = {
        "wl1": jax.random.normal(k1, (H, H), jnp.float32) * scale,
        "wr1": jax.random.normal(k2, (H, H), jnp.float32) * scale,
        "bl1": jax.random.normal(k3, (H,), jnp.float32) * 0.1,
        "wl2": jax.random.normal(k4, (H, H), jnp.float32) * scale,
        "wr2": jax.random.normal(k5, (H, H), jnp.float32) * scale,
        "bl2": jax.random.normal(k6, (H,), jnp.float32) * 0.1,
    }

    # One-time prep (graph scatter + degree, weight transpose/stack/pad) off the hot path.
    a_counts, inv_deg = prepare_graph(edge_index, N)
    weights, meta = prepare_params(params)

    out = gs_forward(x, a_counts, inv_deg,
                     weights["w1"], weights["b1"], weights["w2"], weights["b2"],
                     in_channels=meta["in_channels"],
                     out_channels=meta["out_channels"])
    out = jax.block_until_ready(out)

    ref = gs_reference(x, edge_index, params)
    assert out.shape == (N, H)
    assert jnp.allclose(out, ref, atol=2e-3, rtol=2e-3), "Pallas kernel mismatch vs reference"

    print("KERNEL_OK")
</pallas_src>

<mosaic_0001>
module attributes {stable_mosaic.version = 11 : i64} {
  func.func @_sage_layer_kernel(%arg0: i32, %arg1: i32, %arg2: memref<128x128xbf16, #tpu.memory_space<vmem>>, %arg3: memref<128x128xf32, #tpu.memory_space<vmem>>, %arg4: memref<128x128xf32, #tpu.memory_space<vmem>>, %arg5: memref<128x1xf32, #tpu.memory_space<vmem>>, %arg6: memref<256x128xf32, #tpu.memory_space<vmem>>, %arg7: memref<1x128xf32, #tpu.memory_space<vmem>>, %arg8: memref<128x128xf32, #tpu.memory_space<vmem>>, %arg9: memref<128x256xf32, #tpu.memory_space<vmem>>) attributes {dimension_semantics = [#tpu.dimension_semantics<parallel>, #tpu.dimension_semantics<arbitrary>], iteration_bounds = array<i64: 3, 3>, scalar_prefetch = 0 : i64, scratch_operands = 1 : i64, tpu.core_type = #tpu.core_type<tc>, window_params = [{transform_indices = @transform_0, window_bounds = array<i64: 128, 128>}, {transform_indices = @transform_1, window_bounds = array<i64: 128, 128>}, {transform_indices = @transform_2, window_bounds = array<i64: 128, 128>}, {transform_indices = @transform_3, window_bounds = array<i64: 128, 1>}, {pipeline_mode = #tpu.pipeline_mode<synchronous>, transform_indices = @transform_4, window_bounds = array<i64: 256, 128>}, {pipeline_mode = #tpu.pipeline_mode<synchronous>, transform_indices = @transform_5, window_bounds = array<i64: 1, 128>}, {transform_indices = @transform_6, window_bounds = array<i64: 128, 128>}]} {
    %c0_i32 = arith.constant 0 : i32
    %0 = arith.cmpi eq, %arg1, %c0_i32 : i32
    %1 = arith.extui %0 : i1 to i32
    %c0_i32_0 = arith.constant 0 : i32
    %2 = arith.cmpi ne, %1, %c0_i32_0 : i32
    scf.if %2 {
      %cst_9 = arith.constant 0.000000e+00 : f32
      %13 = vector.broadcast %cst_9 : f32 to vector<128x128xf32>
      %c0_10 = arith.constant 0 : index
      %c0_11 = arith.constant 0 : index
      %14 = vector.load %arg9[%c0_10, %c0_11] : memref<128x256xf32, #tpu.memory_space<vmem>>, vector<128x128xf32>
      tpu.vector_store %arg9[%c0_10, %c0_11], %13 {strides = array<i32>} : memref<128x256xf32, #tpu.memory_space<vmem>>, vector<128x128xf32>,
      %c0_12 = arith.constant 0 : index
      %c0_13 = arith.constant 0 : index
      %15 = vector.load %arg4[%c0_12, %c0_13] : memref<128x128xf32, #tpu.memory_space<vmem>>, vector<128x128xf32>
      %c0_14 = arith.constant 0 : index
      %c128 = arith.constant 128 : index
      %16 = vector.load %arg9[%c0_14, %c128] : memref<128x256xf32, #tpu.memory_space<vmem>>, vector<128x128xf32>
      tpu.vector_store %arg9[%c0_14, %c128], %15 {strides = array<i32>} : memref<128x256xf32, #tpu.memory_space<vmem>>, vector<128x128xf32>,
    } else {
    }
    %c0 = arith.constant 0 : index
    %c0_1 = arith.constant 0 : index
    %3 = vector.load %arg9[%c0, %c0_1] : memref<128x256xf32, #tpu.memory_space<vmem>>, vector<128x128xf32>
    %c0_2 = arith.constant 0 : index
    %c0_3 = arith.constant 0 : index
    %4 = vector.load %arg2[%c0_2, %c0_3] : memref<128x128xbf16, #tpu.memory_space<vmem>>, vector<128x128xbf16>
    %5 = arith.extf %4 : vector<128x128xbf16> to vector<128x128xf32>
    %c0_4 = arith.constant 0 : index
    %c0_5 = arith.constant 0 : index
    %6 = vector.load %arg3[%c0_4, %c0_5] : memref<128x128xf32, #tpu.memory_space<vmem>>, vector<128x128xf32>
    %cst = arith.constant dense<0.000000e+00> : vector<128x128xf32>
    %7 = tpu.matmul %5, %6, %cst {dimension_numbers = #tpu.dot_dimension_numbers<[1], [0], [0], [1], [0, 0, 1, 1], [], []>} : vector<128x128xf32>, vector<128x128xf32>, vector<128x128xf32> -> vector<128x128xf32>
    %8 = arith.addf %3, %7 : vector<128x128xf32>
    %c0_6 = arith.constant 0 : index
    %c0_7 = arith.constant 0 : index
    %9 = vector.load %arg9[%c0_6, %c0_7] : memref<128x256xf32, #tpu.memory_space<vmem>>, vector<128x128xf32>
    tpu.vector_store %arg9[%c0_6, %c0_7], %8 {strides = array<i32>} : memref<128x256xf32, #tpu.memory_space<vmem>>, vector<128x128xf32>,
    %c2_i32 = arith.constant 2 : i32
    %10 = arith.cmpi eq, %arg1, %c2_i32 : i32
    %11 = arith.extui %10 : i1 to i32
    %c0_i32_8 = arith.constant 0 : i32
    %12 = arith.cmpi ne, %11, %c0_i32_8 : i32
    scf.if %12 {
      %c0_9 = arith.constant 0 : index
      %c0_10 = arith.constant 0 : index
      %13 = vector.load %arg9[%c0_9, %c0_10] : memref<128x256xf32, #tpu.memory_space<vmem>>, vector<128x128xf32>
      %c0_11 = arith.constant 0 : index
      %c0_12 = arith.constant 0 : index
      %14 = vector.load %arg5[%c0_11, %c0_12] : memref<128x1xf32, #tpu.memory_space<vmem>>, vector<128x1xf32>
      %15 = vector.broadcast %14 : vector<128x1xf32> to vector<128x128xf32>
      %16 = arith.mulf %13, %15 : vector<128x128xf32>
      %c0_13 = arith.constant 0 : index
      %c0_14 = arith.constant 0 : index
      %17 = vector.load %arg9[%c0_13, %c0_14] : memref<128x256xf32, #tpu.memory_space<vmem>>, vector<128x128xf32>
      tpu.vector_store %arg9[%c0_13, %c0_14], %16 {strides = array<i32>} : memref<128x256xf32, #tpu.memory_space<vmem>>, vector<128x128xf32>,
      %c0_15 = arith.constant 0 : index
      %c0_16 = arith.constant 0 : index
      %18 = vector.load %arg9[%c0_15, %c0_16] : memref<128x256xf32, #tpu.memory_space<vmem>>, vector<128x256xf32>
      %c0_17 = arith.constant 0 : index
      %c0_18 = arith.constant 0 : index
      %19 = vector.load %arg6[%c0_17, %c0_18] : memref<256x128xf32, #tpu.memory_space<vmem>>, vector<256x128xf32>
      %cst_19 = arith.constant dense<0.000000e+00> : vector<128x128xf32>
      %20 = tpu.matmul %18, %19, %cst_19 {dimension_numbers = #tpu.dot_dimension_numbers<[1], [0], [0], [1], [0, 0, 1, 1], [], []>} : vector<128x256xf32>, vector<256x128xf32>, vector<128x128xf32> -> vector<128x128xf32>
      %c0_20 = arith.constant 0 : index
      %c0_21 = arith.constant 0 : index
      %21 = vector.load %arg7[%c0_20, %c0_21] : memref<1x128xf32, #tpu.memory_space<vmem>>, vector<1x128xf32>
      %22 = vector.broadcast %21 : vector<1x128xf32> to vector<128x128xf32>
      %23 = arith.addf %20, %22 : vector<128x128xf32>
      %cst_22 = arith.constant 0.000000e+00 : f32
      %24 = vector.broadcast %cst_22 : f32 to vector<128x128xf32>
      %25 = arith.maximumf %23, %24 : vector<128x128xf32>
      %c0_23 = arith.constant 0 : index
      %c0_24 = arith.constant 0 : index
      %26 = vector.load %arg8[%c0_23, %c0_24] : memref<128x128xf32, #tpu.memory_space<vmem>>, vector<128x128xf32>
      tpu.vector_store %arg8[%c0_23, %c0_24], %25 {strides = array<i32>} : memref<128x128xf32, #tpu.memory_space<vmem>>, vector<128x128xf32>,
    } else {
    }
    return
  }
  func.func @transform_0(%arg0: i32, %arg1: i32) -> (i32, i32) {
    %c0_i32 = arith.constant 0 : i32
    return %arg0, %arg1 : i32, i32
  }
  func.func @transform_1(%arg0: i32, %arg1: i32) -> (i32, i32) {
    %c0_i32 = arith.constant 0 : i32
    %c0_i32_0 = arith.constant 0 : i32
    return %arg1, %c0_i32 : i32, i32
  }
  func.func @transform_2(%arg0: i32, %arg1: i32) -> (i32, i32) {
    %c0_i32 = arith.constant 0 : i32
    %c0_i32_0 = arith.constant 0 : i32
    return %arg0, %c0_i32 : i32, i32
  }
  func.func @transform_3(%arg0: i32, %arg1: i32) -> (i32, i32) {
    %c0_i32 = arith.constant 0 : i32
    %c0_i32_0 = arith.constant 0 : i32
    return %arg0, %c0_i32 : i32, i32
  }
  func.func @transform_4(%arg0: i32, %arg1: i32) -> (i32, i32) {
    %c0_i32 = arith.constant 0 : i32
    %c0_i32_0 = arith.constant 0 : i32
    %c0_i32_1 = arith.constant 0 : i32
    return %c0_i32, %c0_i32_0 : i32, i32
  }
  func.func @transform_5(%arg0: i32, %arg1: i32) -> (i32, i32) {
    %c0_i32 = arith.constant 0 : i32
    %c0_i32_0 = arith.constant 0 : i32
    %c0_i32_1 = arith.constant 0 : i32
    return %c0_i32, %c0_i32_0 : i32, i32
  }
  func.func @transform_6(%arg0: i32, %arg1: i32) -> (i32, i32) {
    %c0_i32 = arith.constant 0 : i32
    %c0_i32_0 = arith.constant 0 : i32
    return %arg0, %c0_i32 : i32, i32
  }
}

module attributes {stable_mosaic.version = 11 : i64} {
  func.func @_sage_layer_kernel(%arg0: i32, %arg1: i32, %arg2: memref<128x128xbf16, #tpu.memory_space<vmem>>, %arg3: memref<128x128xf32, #tpu.memory_space<vmem>>, %arg4: memref<128x128xf32, #tpu.memory_space<vmem>>, %arg5: memref<128x1xf32, #tpu.memory_space<vmem>>, %arg6: memref<256x128xf32, #tpu.memory_space<vmem>>, %arg7: memref<1x128xf32, #tpu.memory_space<vmem>>, %arg8: memref<128x128xf32, #tpu.memory_space<vmem>>, %arg9: memref<128x256xf32, #tpu.memory_space<vmem>>) attributes {dimension_semantics = [#tpu.dimension_semantics<parallel>, #tpu.dimension_semantics<arbitrary>], iteration_bounds = array<i64: 3, 3>, scalar_prefetch = 0 : i64, scratch_operands = 1 : i64, tpu.core_type = #tpu.core_type<tc>, window_params = [{transform_indices = @transform_0, window_bounds = array<i64: 128, 128>}, {transform_indices = @transform_1, window_bounds = array<i64: 128, 128>}, {transform_indices = @transform_2, window_bounds = array<i64: 128, 128>}, {transform_indices = @transform_3, window_bounds = array<i64: 128, 1>}, {pipeline_mode = #tpu.pipeline_mode<synchronous>, transform_indices = @transform_4, window_bounds = array<i64: 256, 128>}, {pipeline_mode = #tpu.pipeline_mode<synchronous>, transform_indices = @transform_5, window_bounds = array<i64: 1, 128>}, {transform_indices = @transform_6, window_bounds = array<i64: 128, 128>}]} {
    %c0_i32 = arith.constant 0 : i32
    %0 = arith.cmpi eq, %arg1, %c0_i32 : i32
    %1 = arith.extui %0 : i1 to i32
    %c0_i32_0 = arith.constant 0 : i32
    %2 = arith.cmpi ne, %1, %c0_i32_0 : i32
    scf.if %2 {
      %cst_9 = arith.constant 0.000000e+00 : f32
      %13 = vector.broadcast %cst_9 : f32 to vector<128x128xf32>
      %c0_10 = arith.constant 0 : index
      %c0_11 = arith.constant 0 : index
      %14 = vector.load %arg9[%c0_10, %c0_11] : memref<128x256xf32, #tpu.memory_space<vmem>>, vector<128x128xf32>
      tpu.vector_store %arg9[%c0_10, %c0_11], %13 {strides = array<i32>} : memref<128x256xf32, #tpu.memory_space<vmem>>, vector<128x128xf32>,
      %c0_12 = arith.constant 0 : index
      %c0_13 = arith.constant 0 : index
      %15 = vector.load %arg4[%c0_12, %c0_13] : memref<128x128xf32, #tpu.memory_space<vmem>>, vector<128x128xf32>
      %c0_14 = arith.constant 0 : index
      %c128 = arith.constant 128 : index
      %16 = vector.load %arg9[%c0_14, %c128] : memref<128x256xf32, #tpu.memory_space<vmem>>, vector<128x128xf32>
      tpu.vector_store %arg9[%c0_14, %c128], %15 {strides = array<i32>} : memref<128x256xf32, #tpu.memory_space<vmem>>, vector<128x128xf32>,
    } else {
    }
    %c0 = arith.constant 0 : index
    %c0_1 = arith.constant 0 : index
    %3 = vector.load %arg9[%c0, %c0_1] : memref<128x256xf32, #tpu.memory_space<vmem>>, vector<128x128xf32>
    %c0_2 = arith.constant 0 : index
    %c0_3 = arith.constant 0 : index
    %4 = vector.load %arg2[%c0_2, %c0_3] : memref<128x128xbf16, #tpu.memory_space<vmem>>, vector<128x128xbf16>
    %5 = arith.extf %4 : vector<128x128xbf16> to vector<128x128xf32>
    %c0_4 = arith.constant 0 : index
    %c0_5 = arith.constant 0 : index
    %6 = vector.load %arg3[%c0_4, %c0_5] : memref<128x128xf32, #tpu.memory_space<vmem>>, vector<128x128xf32>
    %cst = arith.constant dense<0.000000e+00> : vector<128x128xf32>
    %7 = tpu.matmul %5, %6, %cst {dimension_numbers = #tpu.dot_dimension_numbers<[1], [0], [0], [1], [0, 0, 1, 1], [], []>} : vector<128x128xf32>, vector<128x128xf32>, vector<128x128xf32> -> vector<128x128xf32>
    %8 = arith.addf %3, %7 : vector<128x128xf32>
    %c0_6 = arith.constant 0 : index
    %c0_7 = arith.constant 0 : index
    %9 = vector.load %arg9[%c0_6, %c0_7] : memref<128x256xf32, #tpu.memory_space<vmem>>, vector<128x128xf32>
    tpu.vector_store %arg9[%c0_6, %c0_7], %8 {strides = array<i32>} : memref<128x256xf32, #tpu.memory_space<vmem>>, vector<128x128xf32>,
    %c2_i32 = arith.constant 2 : i32
    %10 = arith.cmpi eq, %arg1, %c2_i32 : i32
    %11 = arith.extui %10 : i1 to i32
    %c0_i32_8 = arith.constant 0 : i32
    %12 = arith.cmpi ne, %11, %c0_i32_8 : i32
    scf.if %12 {
      %c0_9 = arith.constant 0 : index
      %c0_10 = arith.constant 0 : index
      %13 = vector.load %arg9[%c0_9, %c0_10] : memref<128x256xf32, #tpu.memory_space<vmem>>, vector<128x128xf32>
      %c0_11 = arith.constant 0 : index
      %c0_12 = arith.constant 0 : index
      %14 = vector.load %arg5[%c0_11, %c0_12] : memref<128x1xf32, #tpu.memory_space<vmem>>, vector<128x1xf32>
      %15 = vector.broadcast %14 : vector<128x1xf32> to vector<128x128xf32>
      %16 = arith.mulf %13, %15 : vector<128x128xf32>
      %c0_13 = arith.constant 0 : index
      %c0_14 = arith.constant 0 : index
      %17 = vector.load %arg9[%c0_13, %c0_14] : memref<128x256xf32, #tpu.memory_space<vmem>>, vector<128x128xf32>
      tpu.vector_store %arg9[%c0_13, %c0_14], %16 {strides = array<i32>} : memref<128x256xf32, #tpu.memory_space<vmem>>, vector<128x128xf32>,
      %c0_15 = arith.constant 0 : index
      %c0_16 = arith.constant 0 : index
      %18 = vector.load %arg9[%c0_15, %c0_16] : memref<128x256xf32, #tpu.memory_space<vmem>>, vector<128x256xf32>
      %c0_17 = arith.constant 0 : index
      %c0_18 = arith.constant 0 : index
      %19 = vector.load %arg6[%c0_17, %c0_18] : memref<256x128xf32, #tpu.memory_space<vmem>>, vector<256x128xf32>
      %cst_19 = arith.constant dense<0.000000e+00> : vector<128x128xf32>
      %20 = tpu.matmul %18, %19, %cst_19 {dimension_numbers = #tpu.dot_dimension_numbers<[1], [0], [0], [1], [0, 0, 1, 1], [], []>} : vector<128x256xf32>, vector<256x128xf32>, vector<128x128xf32> -> vector<128x128xf32>
      %c0_20 = arith.constant 0 : index
      %c0_21 = arith.constant 0 : index
      %21 = vector.load %arg7[%c0_20, %c0_21] : memref<1x128xf32, #tpu.memory_space<vmem>>, vector<1x128xf32>
      %22 = vector.broadcast %21 : vector<1x128xf32> to vector<128x128xf32>
      %23 = arith.addf %20, %22 : vector<128x128xf32>
      %c0_22 = arith.constant 0 : index
      %c0_23 = arith.constant 0 : index
      %24 = vector.load %arg8[%c0_22, %c0_23] : memref<128x128xf32, #tpu.memory_space<vmem>>, vector<128x128xf32>
      tpu.vector_store %arg8[%c0_22, %c0_23], %23 {strides = array<i32>} : memref<128x128xf32, #tpu.memory_space<vmem>>, vector<128x128xf32>,
    } else {
    }
    return
  }
  func.func @transform_0(%arg0: i32, %arg1: i32) -> (i32, i32) {
    %c0_i32 = arith.constant 0 : i32
    return %arg0, %arg1 : i32, i32
  }
  func.func @transform_1(%arg0: i32, %arg1: i32) -> (i32, i32) {
    %c0_i32 = arith.constant 0 : i32
    %c0_i32_0 = arith.constant 0 : i32
    return %arg1, %c0_i32 : i32, i32
  }
  func.func @transform_2(%arg0: i32, %arg1: i32) -> (i32, i32) {
    %c0_i32 = arith.constant 0 : i32
    %c0_i32_0 = arith.constant 0 : i32
    return %arg0, %c0_i32 : i32, i32
  }
  func.func @transform_3(%arg0: i32, %arg1: i32) -> (i32, i32) {
    %c0_i32 = arith.constant 0 : i32
    %c0_i32_0 = arith.constant 0 : i32
    return %arg0, %c0_i32 : i32, i32
  }
  func.func @transform_4(%arg0: i32, %arg1: i32) -> (i32, i32) {
    %c0_i32 = arith.constant 0 : i32
    %c0_i32_0 = arith.constant 0 : i32
    %c0_i32_1 = arith.constant 0 : i32
    return %c0_i32, %c0_i32_0 : i32, i32
  }
  func.func @transform_5(%arg0: i32, %arg1: i32) -> (i32, i32) {
    %c0_i32 = arith.constant 0 : i32
    %c0_i32_0 = arith.constant 0 : i32
    %c0_i32_1 = arith.constant 0 : i32
    return %c0_i32, %c0_i32_0 : i32, i32
  }
  func.func @transform_6(%arg0: i32, %arg1: i32) -> (i32, i32) {
    %c0_i32 = arith.constant 0 : i32
    %c0_i32_0 = arith.constant 0 : i32
    return %arg0, %c0_i32 : i32, i32
  }
}

</mosaic_0001>

<llo_original>
// kernel: gs_forward.2
$region0: #{gs_forward.2}
  #allocation0 [shape = 'u32[]', space=smem, size = 0x4, offset = 0x4, fixed_abs, tag = 'smem constant byte address 0x4 - core index']
  #allocation1 [shape = 'u32[144,128]{1,0:T(1,128)}', space=vmem, size = 0x12000, scoped, tag = 'internal scratch']
  #allocation2 [shape = 'f32[128,256]{1,0:T(8,128)}', space=vmem, size = 0x20000, scoped, tag = 'scratch operand']
  %s0 = inlined_call_operand.vmem [shape: bf16[384,384], index: 0, kind: input, shape index: {}]
  %s1 = inlined_call_operand.vmem [shape: f32[384,128], index: 1, kind: input, shape index: {}, may-alias: {1,2}]
  %s2 = inlined_call_operand.vmem [shape: f32[384,128], index: 2, kind: input, shape index: {}, may-alias: {1,2}]
  %s3 = inlined_call_operand.vmem [shape: f32[384,1], index: 3, kind: input, shape index: {}]
  %s4 = inlined_call_operand.vmem [shape: f32[256,128], index: 4, kind: input, shape index: {}]
  %s5 = inlined_call_operand.vmem [shape: f32[1,128], index: 5, kind: input, shape index: {}]
  %s6 = inlined_call_operand.vmem [shape: f32[384,128], index: 6, kind: output, shape index: {}]
  %s7 = sld [smem:[#allocation0]]
  $region106: #{gs_forward.2} parent=0
    _
  %s9 = ssub.s32 1, %s7
  %s10 = scalar_select 0, %s9, %s7
  $region1: #{gs_forward.2} parent=0
    #allocation3 [shape = 'u8[65536]{0}', space=vmem, size = 0x10000, scoped, tag = 'input window, operand 0']
    loop: start=0, step=1, limit=11
    $region2: #{gs_forward.2} parent=1 // loop_pre_header
      _
    $region3: #{gs_forward.2} parent=1 // loop_header
      %s12 = sphi 0, %s16
      %p13 = scmp.ge.s32.totalorder %s12, 11
      %s19 = sphi 0, %s31
      %s20 = sphi 0, %s27
      %s21 = sphi 0, %s19
      %s22 = sphi 0, %s20
      %s23 = sphi 0, %s21
      %s24 = sphi 0, %s22
      %s36 = sphi 0, %s38
      %s39 = sphi 0, %s36
      %s40 = sphi 0, %s39
      %s56 = sphi 0, %s40
      %s62 = sphi 0, %s64
      %s65 = sphi 0, %s62
      %s66 = sphi 0, %s65
      %s82 = sphi 0, %s66
      %s88 = sphi 0, %s90
      %s91 = sphi 0, %s88
      %s92 = sphi 0, %s91
      %s108 = sphi 0, %s92
      %s114 = sphi 0, %s116
      %s117 = sphi 0, %s114
      %s118 = sphi 0, %s117
      %s134 = sphi 0, %s118
      %s138 = sphi 0, %s138
      %s140 = sphi 0, %s138
      %s141 = sphi 0, %s140
      %s155 = sphi 0, %s141
      %s159 = sphi 0, %s159
      %s161 = sphi 0, %s159
      %s162 = sphi 0, %s161
      %s176 = sphi 0, %s162
      %s182 = sphi 0, %s184
      %s185 = sphi 0, %s182
      %s186 = sphi 0, %s185
      %s202 = sphi 0, %s186
    $region4: #{gs_forward.2} parent=1 // loop_header_branch
      %15 = sbr.rel (%p13) target = $region8
    $region5: #{gs_forward.2} parent=1 // loop_body
      %s17 = ssub.s32 %s12, 1
      %s18 = ssub.s32 %s12, 2
      %s25 = sadd.s32 1, %s20
      %p26 = scmp.ge.s32.totalorder %s25, 3
      %s27 = scalar_select %p26, 0, %s25
      %s28 = sadd.s32 1, %s19
      %s29 = scalar_select %p26, %s28, %s19
      %p30 = scmp.ge.s32.totalorder %s29, 3
      %s31 = scalar_select %p30, 0, %s29
      %s32 = ssub.s32 %s19, %s31
      %s33 = ssub.s32 %s20, %s27
      %s34 = sor.u32 %s32, %s33
      %p35 = scmp.eq.s32.totalorder %s34, 0
      %s37 = sadd.s32 %s36, 1
      %s38 = scalar_select %p35, %s36, %s37
      %p41 = pneg %p35
      %p42 = scmp.eq.s32.totalorder %s12, 8
      %p43 = por %p41, %p42
      %p44 = scmp.ne.s32.totalorder %s36, %s39
      %p45 = scmp.eq.s32.totalorder %s12, 0
      %p46 = por %p44, %p45
      %p47 = scmp.ne.s32.totalorder %s36, %s39
      %p48 = scmp.eq.s32.totalorder %s17, 8
      %p49 = por %p47, %p48
      %p50 = scmp.ne.s32.totalorder %s39, %s40
      %p51 = scmp.eq.s32.totalorder %s17, 0
      %p52 = por %p50, %p51
      %p53 = scmp.ne.s32.totalorder %s39, %s40
      %p54 = scmp.eq.s32.totalorder %s18, 8
      %p55 = por %p53, %p54
      %p57 = scmp.ne.s32.totalorder %s40, %s56
      %p58 = scmp.eq.s32.totalorder %s18, 0
      %p59 = por %p57, %p58
      %s60 = ssub.s32 %s20, %s27
      %p61 = scmp.eq.s32.totalorder %s60, 0
      %s63 = sadd.s32 %s62, 1
      %s64 = scalar_select %p61, %s62, %s63
      %p67 = pneg %p61
      %p68 = scmp.eq.s32.totalorder %s12, 8
      %p69 = por %p67, %p68
      %p70 = scmp.ne.s32.totalorder %s62, %s65
      %p71 = scmp.eq.s32.totalorder %s12, 0
      %p72 = por %p70, %p71
      %p73 = scmp.ne.s32.totalorder %s62, %s65
      %p74 = scmp.eq.s32.totalorder %s17, 8
      %p75 = por %p73, %p74
      %p76 = scmp.ne.s32.totalorder %s65, %s66
      %p77 = scmp.eq.s32.totalorder %s17, 0
      %p78 = por %p76, %p77
      %p79 = scmp.ne.s32.totalorder %s65, %s66
      %p80 = scmp.eq.s32.totalorder %s18, 8
      %p81 = por %p79, %p80
      %p83 = scmp.ne.s32.totalorder %s66, %s82
      %p84 = scmp.eq.s32.totalorder %s18, 0
      %p85 = por %p83, %p84
      %s86 = ssub.s32 %s19, %s31
      %p87 = scmp.eq.s32.totalorder %s86, 0
      %s89 = sadd.s32 %s88, 1
      %s90 = scalar_select %p87, %s88, %s89
      %p93 = pneg %p87
      %p94 = scmp.eq.s32.totalorder %s12, 8
      %p95 = por %p93, %p94
      %p96 = scmp.ne.s32.totalorder %s88, %s91
      %p97 = scmp.eq.s32.totalorder %s12, 0
      %p98 = por %p96, %p97
      %p99 = scmp.ne.s32.totalorder %s88, %s91
      %p100 = scmp.eq.s32.totalorder %s17, 8
      %p101 = por %p99, %p100
      %p102 = scmp.ne.s32.totalorder %s91, %s92
      %p103 = scmp.eq.s32.totalorder %s17, 0
      %p104 = por %p102, %p103
      %p105 = scmp.ne.s32.totalorder %s91, %s92
      %p106 = scmp.eq.s32.totalorder %s18, 8
      %p107 = por %p105, %p106
      %p109 = scmp.ne.s32.totalorder %s92, %s108
      %p110 = scmp.eq.s32.totalorder %s18, 0
      %p111 = por %p109, %p110
      %s112 = ssub.s32 %s19, %s31
      %p113 = scmp.eq.s32.totalorder %s112, 0
      %s115 = sadd.s32 %s114, 1
      %s116 = scalar_select %p113, %s114, %s115
      %p119 = pneg %p113
      %p120 = scmp.eq.s32.totalorder %s12, 8
      %p121 = por %p119, %p120
      %p122 = scmp.ne.s32.totalorder %s114, %s117
      %p123 = scmp.eq.s32.totalorder %s12, 0
      %p124 = por %p122, %p123
      %p125 = scmp.ne.s32.totalorder %s114, %s117
      %p126 = scmp.eq.s32.totalorder %s17, 8
      %p127 = por %p125, %p126
      %p128 = scmp.ne.s32.totalorder %s117, %s118
      %p129 = scmp.eq.s32.totalorder %s17, 0
      %p130 = por %p128, %p129
      %p131 = scmp.ne.s32.totalorder %s117, %s118
      %p132 = scmp.eq.s32.totalorder %s18, 8
      %p133 = por %p131, %p132
      %p135 = scmp.ne.s32.totalorder %s118, %s134
      %p136 = scmp.eq.s32.totalorder %s18, 0
      %p137 = por %p135, %p136
      %s139 = sadd.s32 %s138, 1
      %p142 = scmp.eq.s32.totalorder %s12, 8
      %p143 = scmp.ne.s32.totalorder %s138, %s140
      %p144 = scmp.eq.s32.totalorder %s12, 0
      %p145 = por %p143, %p144
      %p146 = scmp.ne.s32.totalorder %s138, %s140
      %p147 = scmp.eq.s32.totalorder %s17, 8
      %p148 = por %p146, %p147
      %p149 = scmp.ne.s32.totalorder %s140, %s141
      %p150 = scmp.eq.s32.totalorder %s17, 0
      %p151 = por %p149, %p150
      %p152 = scmp.ne.s32.totalorder %s140, %s141
      %p153 = scmp.eq.s32.totalorder %s18, 8
      %p154 = por %p152, %p153
      %p156 = scmp.ne.s32.totalorder %s141, %s155
      %p157 = scmp.eq.s32.totalorder %s18, 0
      %p158 = por %p156, %p157
      %s160 = sadd.s32 %s159, 1
      %p163 = scmp.eq.s32.totalorder %s12, 8
      %p164 = scmp.ne.s32.totalorder %s159, %s161
      %p165 = scmp.eq.s32.totalorder %s12, 0
      %p166 = por %p164, %p165
      %p167 = scmp.ne.s32.totalorder %s159, %s161
      %p168 = scmp.eq.s32.totalorder %s17, 8
      %p169 = por %p167, %p168
      %p170 = scmp.ne.s32.totalorder %s161, %s162
      %p171 = scmp.eq.s32.totalorder %s17, 0
      %p172 = por %p170, %p171
      %p173 = scmp.ne.s32.totalorder %s161, %s162
      %p174 = scmp.eq.s32.totalorder %s18, 8
      %p175 = por %p173, %p174
      %p177 = scmp.ne.s32.totalorder %s162, %s176
      %p178 = scmp.eq.s32.totalorder %s18, 0
      %p179 = por %p177, %p178
      %s180 = ssub.s32 %s19, %s31
      %p181 = scmp.eq.s32.totalorder %s180, 0
      %s183 = sadd.s32 %s182, 1
      %s184 = scalar_select %p181, %s182, %s183
      %p187 = pneg %p181
      %p188 = scmp.eq.s32.totalorder %s12, 8
      %p189 = por %p187, %p188
      %p190 = scmp.ne.s32.totalorder %s182, %s185
      %p191 = scmp.eq.s32.totalorder %s12, 0
      %p192 = por %p190, %p191
      %p193 = scmp.ne.s32.totalorder %s182, %s185
      %p194 = scmp.eq.s32.totalorder %s17, 8
      %p195 = por %p193, %p194
      %p196 = scmp.ne.s32.totalorder %s185, %s186
      %p197 = scmp.eq.s32.totalorder %s17, 0
      %p198 = por %p196, %p197
      %p199 = scmp.ne.s32.totalorder %s185, %s186
      %p200 = scmp.eq.s32.totalorder %s18, 8
      %p201 = por %p199, %p200
      %p203 = scmp.ne.s32.totalorder %s186, %s202
      %p204 = scmp.eq.s32.totalorder %s18, 0
      %p205 = por %p203, %p204
      %p206 = scmp.le.s32.totalorder 1, %s12
      %p207 = scmp.lt.s32.totalorder %s12, 10
      %p208 = pnand %p206, %p207
      %p209 = pneg %p208
      // Predicated region
      $region9: #{gs_forward.2} parent=5 // pred_check
        _
      $region10: #{gs_forward.2} parent=5 // pred_check_branch
        %211 = sbr.rel (%p208) target = $region12
      $region11: #{gs_forward.2} parent=5 // pred_region
        %s212 = ssub.s32 %s12, 1
        // Predicated region
        $region13: #{gs_forward.2} parent=11 // pred_check
          %p213 = pneg %p151
        $region14: #{gs_forward.2} parent=11 // pred_check_branch
          %215 = sbr.rel (%p213) target = $region16
        $region15: #{gs_forward.2} parent=11 // pred_region
          _
        $region16: #{gs_forward.2} parent=11 // pred_fallthru
          _
        // Predicated region
        $region17: #{gs_forward.2} parent=11 // pred_check
          %p216 = pneg %p172
        $region18: #{gs_forward.2} parent=11 // pred_check_branch
          %218 = sbr.rel (%p216) target = $region20
        $region19: #{gs_forward.2} parent=11 // pred_region
          _
        $region20: #{gs_forward.2} parent=11 // pred_fallthru
          _
      $region12: #{gs_forward.2} parent=5 // pred_fallthru
        _
      %p219 = scmp.lt.s32.totalorder %s12, 9
      // Predicated region
      $region21: #{gs_forward.2} parent=5 // pred_check
        %p220 = pneg %p219
      $region22: #{gs_forward.2} parent=5 // pred_check_branch
        %222 = sbr.rel (%p220) target = $region24
      $region23: #{gs_forward.2} parent=5 // pred_region
        // Predicated region
        $region25: #{gs_forward.2} parent=23 // pred_check
          %p223 = pneg %p46
        $region26: #{gs_forward.2} parent=23 // pred_check_branch
          %225 = sbr.rel (%p223) target = $region28
        $region27: #{gs_forward.2} parent=23 // pred_region
          %s226 = sand.u32 %s36, 1
          %s227 = sand.u32 %s36, 1
          %s228 = smul.addr %s227, 64
          %s229 = scalar_lea.vmem [#allocation3], %s228
          %s230 = smul.u32 16, %s19
          %s231 = smul.addr %s230, 3
          %s232 = sadd.s32 %s20, %s231
          %s233 = smul.addr %s232, 4
          %s234 = scalar_lea.vmem %s0, %s233
          // Predicated region
          $region29: #{gs_forward.2} parent=27 // pred_check
            _
          $region30: #{gs_forward.2} parent=27 // pred_check_branch
            %236 = sbr.rel (0) target = $region32
          $region31: #{gs_forward.2} parent=27 // pred_region
            // Predicated region
            $region33: #{gs_forward.2} parent=31 // pred_check
              _
            $region34: #{gs_forward.2} parent=31 // pred_check_branch
              %238 = sbr.rel target = $region36
            $region35: #{gs_forward.2} parent=31 // pred_region
              // Predicated region
              $region48: #{gs_forward.2} parent=35 // pred_check
                _
              $region49: #{gs_forward.2} parent=35 // pred_check_branch
                %283 = sbr.rel (0) target = $region51
              $region50: #{gs_forward.2} parent=35 // pred_region
                loop: start=0, step=1, limit=1
                $region52: #{gs_forward.2} parent=50 // loop_pre_header
                  _
                $region53: #{gs_forward.2} parent=50 // loop_header
                  %s285 = sphi 0, %s289
                  %p286 = scmp.ge.s32.totalorder %s285, 1
                  %s290 = sphi %s234, %s234
                  %s291 = sphi %s229, %s229
                $region54: #{gs_forward.2} parent=50 // loop_header_branch
                  %288 = sbr.rel (%p286) target = $region58
                $region55: #{gs_forward.2} parent=50 // loop_body
                  _
                $region56: #{gs_forward.2} parent=50 // loop_footer
                  %s289 = sadd.s32 1, %s285
                $region57: #{gs_forward.2} parent=50 // loop_footer_branch
                  %284 = sbr.rel target = $region53
                $region58: #{gs_forward.2} parent=50 // loop_exit
                  _
                loop: start=0, step=1, limit=1
                $region59: #{gs_forward.2} parent=50 // loop_pre_header
                  _
                $region60: #{gs_forward.2} parent=50 // loop_header
                  %s294 = sphi 0, %s298
                  %p295 = scmp.ge.s32.totalorder %s294, 1
                  %s299 = sphi %s234, %s234
                  %s300 = sphi %s229, %s229
                $region61: #{gs_forward.2} parent=50 // loop_header_branch
                  %297 = sbr.rel (%p295) target = $region65
                $region62: #{gs_forward.2} parent=50 // loop_body
                  %v301 = vld [vmem:[%s299] sm:$0xf]
                  %302 = vst [vmem:[%s300] sm:$0xf] %v301
                  %v303 = vld [vmem:[%s299 + $0xc] sm:$0xf]
                  %304 = vst [vmem:[%s300 + $0x4] sm:$0xf] %v303
                  %v305 = vld [vmem:[%s299 + $0x18] sm:$0xf]
                  %306 = vst [vmem:[%s300 + $0x8] sm:$0xf] %v305
                  %v307 = vld [vmem:[%s299 + $0x24] sm:$0xf]
                  %308 = vst [vmem:[%s300 + $0xc] sm:$0xf] %v307
                  %v309 = vld [vmem:[%s299 + $0x30] sm:$0xf]
                  %310 = vst [vmem:[%s300 + $0x10] sm:$0xf] %v309
                  %v311 = vld [vmem:[%s299 + $0x3c] sm:$0xf]
                  %312 = vst [vmem:[%s300 + $0x14] sm:$0xf] %v311
                  %v313 = vld [vmem:[%s299 + $0x48] sm:$0xf]
                  %314 = vst [vmem:[%s300 + $0x18] sm:$0xf] %v313
                  %v315 = vld [vmem:[%s299 + $0x54] sm:$0xf]
                  %316 = vst [vmem:[%s300 + $0x1c] sm:$0xf] %v315
                  %v317 = vld [vmem:[%s299 + $0x60] sm:$0xf]
                  %318 = vst [vmem:[%s300 + $0x20] sm:$0xf] %v317
                  %v319 = vld [vmem:[%s299 + $0x6c] sm:$0xf]
                  %320 = vst [vmem:[%s300 + $0x24] sm:$0xf] %v319
                  %v321 = vld [vmem:[%s299 + $0x78] sm:$0xf]
                  %322 = vst [vmem:[%s300 + $0x28] sm:$0xf] %v321
                  %v323 = vld [vmem:[%s299 + $0x84] sm:$0xf]
                  %324 = vst [vmem:[%s300 + $0x2c] sm:$0xf] %v323
                  %v325 = vld [vmem:[%s299 + $0x90] sm:$0xf]
                  %326 = vst [vmem:[%s300 + $0x30] sm:$0xf] %v325
                  %v327 = vld [vmem:[%s299 + $0x9c] sm:$0xf]
                  %328 = vst [vmem:[%s300 + $0x34] sm:$0xf] %v327
                  %v329 = vld [vmem:[%s299 + $0xa8] sm:$0xf]
                  %330 = vst [vmem:[%s300 + $0x38] sm:$0xf] %v329
                  %v331 = vld [vmem:[%s299 + $0xb4] sm:$0xf]
                  %332 = vst [vmem:[%s300 + $0x3c] sm:$0xf] %v331
                $region63: #{gs_forward.2} parent=50 // loop_footer
                  %s298 = sadd.s32 1, %s294
                $region64: #{gs_forward.2} parent=50 // loop_footer_branch
                  %293 = sbr.rel target = $region60
                $region65: #{gs_forward.2} parent=50 // loop_exit
                  _
              $region51: #{gs_forward.2} parent=35 // pred_fallthru
                _
            $region36: #{gs_forward.2} parent=31 // pred_fallthru
              _
            // Predicated region
            $region37: #{gs_forward.2} parent=31 // pred_check
              _
            $region38: #{gs_forward.2} parent=31 // pred_check_branch
              %240 = sbr.rel (0) target = $region40
            $region39: #{gs_forward.2} parent=31 // pred_region
              loop: start=0, step=1, limit=1
              $region41: #{gs_forward.2} parent=39 // loop_pre_header
                _
              $region42: #{gs_forward.2} parent=39 // loop_header
                %s243 = sphi 0, %s247
                %p244 = scmp.ge.s32.totalorder %s243, 1
                %s248 = sphi %s234, %s234
                %s249 = sphi %s229, %s229
              $region43: #{gs_forward.2} parent=39 // loop_header_branch
                %246 = sbr.rel (%p244) target = $region47
              $region44: #{gs_forward.2} parent=39 // loop_body
                %v250 = vld [vmem:[%s248] sm:$0xf]
                %251 = vst [vmem:[%s249] sm:$0xf] %v250
                %v252 = vld [vmem:[%s248 + $0xc] sm:$0xf]
                %253 = vst [vmem:[%s249 + $0x4] sm:$0xf] %v252
                %v254 = vld [vmem:[%s248 + $0x18] sm:$0xf]
                %255 = vst [vmem:[%s249 + $0x8] sm:$0xf] %v254
                %v256 = vld [vmem:[%s248 + $0x24] sm:$0xf]
                %257 = vst [vmem:[%s249 + $0xc] sm:$0xf] %v256
                %v258 = vld [vmem:[%s248 + $0x30] sm:$0xf]
                %259 = vst [vmem:[%s249 + $0x10] sm:$0xf] %v258
                %v260 = vld [vmem:[%s248 + $0x3c] sm:$0xf]
                %261 = vst [vmem:[%s249 + $0x14] sm:$0xf] %v260
                %v262 = vld [vmem:[%s248 + $0x48] sm:$0xf]
                %263 = vst [vmem:[%s249 + $0x18] sm:$0xf] %v262
                %v264 = vld [vmem:[%s248 + $0x54] sm:$0xf]
                %265 = vst [vmem:[%s249 + $0x1c] sm:$0xf] %v264
                %v266 = vld [vmem:[%s248 + $0x60] sm:$0xf]
                %267 = vst [vmem:[%s249 + $0x20] sm:$0xf] %v266
                %v268 = vld [vmem:[%s248 + $0x6c] sm:$0xf]
                %269 = vst [vmem:[%s249 + $0x24] sm:$0xf] %v268
                %v270 = vld [vmem:[%s248 + $0x78] sm:$0xf]
                %271 = vst [vmem:[%s249 + $0x28] sm:$0xf] %v270
                %v272 = vld [vmem:[%s248 + $0x84] sm:$0xf]
                %273 = vst [vmem:[%s249 + $0x2c] sm:$0xf] %v272
                %v274 = vld [vmem:[%s248 + $0x90] sm:$0xf]
                %275 = vst [vmem:[%s249 + $0x30] sm:$0xf] %v274
                %v276 = vld [vmem:[%s248 + $0x9c] sm:$0xf]
                %277 = vst [vmem:[%s249 + $0x34] sm:$0xf] %v276
                %v278 = vld [vmem:[%s248 + $0xa8] sm:$0xf]
                %279 = vst [vmem:[%s249 + $0x38] sm:$0xf] %v278
                %v280 = vld [vmem:[%s248 + $0xb4] sm:$0xf]
                %281 = vst [vmem:[%s249 + $0x3c] sm:$0xf] %v280
              $region45: #{gs_forward.2} parent=39 // loop_footer
                %s247 = sadd.s32 1, %s243
              $region46: #{gs_forward.2} parent=39 // loop_footer_branch
                %242 = sbr.rel target = $region42
              $region47: #{gs_forward.2} parent=39 // loop_exit
                _
            $region40: #{gs_forward.2} parent=31 // pred_fallthru
              _
          $region32: #{gs_forward.2} parent=27 // pred_fallthru
            _
          %333 = vnop
        $region28: #{gs_forward.2} parent=23 // pred_fallthru
          _
        // Predicated region
        $region66: #{gs_forward.2} parent=23 // pred_check
          %p334 = pneg %p72
        $region67: #{gs_forward.2} parent=23 // pred_check_branch
          %336 = sbr.rel (%p334) target = $region69
        $region68: #{gs_forward.2} parent=23 // pred_region
          %s337 = smul.u32 16, %s20
          %p338 = scmp.lt.s32.totalorder %s337, 47
          %s339 = scalar_select %p338, %s337, 47
          %s340 = smul.addr %s339, 8
          %s341 = scalar_lea.vmem %s1, %s340
          %s342 = smul.u32 16, %s20
        $region69: #{gs_forward.2} parent=23 // pred_fallthru
          _
        // Predicated region
        $region70: #{gs_forward.2} parent=23 // pred_check
          %p343 = pneg %p98
        $region71: #{gs_forward.2} parent=23 // pred_check_branch
          %345 = sbr.rel (%p343) target = $region73
        $region72: #{gs_forward.2} parent=23 // pred_region
          %s346 = smul.u32 16, %s19
          %p347 = scmp.lt.s32.totalorder %s346, 47
          %s348 = scalar_select %p347, %s346, 47
          %s349 = smul.addr %s348, 8
          %s350 = scalar_lea.vmem %s2, %s349
          %s351 = smul.u32 16, %s19
        $region73: #{gs_forward.2} parent=23 // pred_fallthru
          _
        // Predicated region
        $region74: #{gs_forward.2} parent=23 // pred_check
          %p352 = pneg %p124
        $region75: #{gs_forward.2} parent=23 // pred_check_branch
          %354 = sbr.rel (%p352) target = $region77
        $region76: #{gs_forward.2} parent=23 // pred_region
          %s355 = smul.u32 16, %s19
          %p356 = scmp.lt.s32.totalorder %s355, 47
          %s357 = scalar_select %p356, %s355, 47
          %s358 = smul.addr %s357, 8
          %s359 = scalar_lea.vmem %s3, %s358
          %s360 = smul.u32 16, %s19
        $region77: #{gs_forward.2} parent=23 // pred_fallthru
          _
      $region24: #{gs_forward.2} parent=5 // pred_fallthru
        _
      %p361 = scmp.le.s32.totalorder 1, %s12
      %p362 = scmp.lt.s32.totalorder %s12, 10
      %p363 = pnand %p361, %p362
      %p364 = pneg %p363
      // Predicated region
      $region78: #{gs_forward.2} parent=5 // pred_check
        _
      $region79: #{gs_forward.2} parent=5 // pred_check_branch
        %366 = sbr.rel (%p363) target = $region81
      $region80: #{gs_forward.2} parent=5 // pred_region
        %s367 = ssub.s32 %s12, 1
        %s368 = sand.u32 %s39, 1
        %s369 = sand.u32 %s39, 1
        %s370 = smul.addr %s369, 64
        %s371 = scalar_lea.vmem [#allocation3], %s370
        // Predicated region
        $region82: #{gs_forward.2} parent=80 // pred_check
          %p372 = pneg %p52
        $region83: #{gs_forward.2} parent=80 // pred_check_branch
          %374 = sbr.rel (%p372) target = $region85
        $region84: #{gs_forward.2} parent=80 // pred_region
          _
        $region85: #{gs_forward.2} parent=80 // pred_fallthru
          _
        %s375 = sand.u32 %s39, 1
        %s376 = sand.u32 %s39, 1
        %s377 = smul.addr %s376, 64
        %s378 = scalar_lea.vmem [#allocation3], %s377
        %p379 = pneg %p52
        %p380 = pneg %p49
        %s381 = smul.u32 16, %s22
        %p382 = scmp.lt.s32.totalorder %s381, 47
        %s383 = scalar_select %p382, %s381, 47
        %s384 = smul.addr %s383, 8
        %s385 = scalar_lea.vmem %s1, %s384
        %p386 = pneg %p78
        %p387 = pneg %p75
        %s388 = smul.u32 16, %s21
        %p389 = scmp.lt.s32.totalorder %s388, 47
        %s390 = scalar_select %p389, %s388, 47
        %s391 = smul.addr %s390, 8
        %s392 = scalar_lea.vmem %s2, %s391
        %p393 = pneg %p104
        %p394 = pneg %p101
        %s395 = smul.u32 16, %s21
        %p396 = scmp.lt.s32.totalorder %s395, 47
        %s397 = scalar_select %p396, %s395, 47
        %s398 = smul.addr %s397, 8
        %s399 = scalar_lea.vmem %s3, %s398
        %p400 = pneg %p130
        %p401 = pneg %p127
        %p402 = pneg %p151
        %p403 = pneg %p148
        %p404 = pneg %p172
        %p405 = pneg %p169
        %p406 = pneg %p198
        %p407 = pneg %p195
        %s408 = smul.u32 16, %s21
        %p409 = scmp.lt.s32.totalorder %s408, 47
        %s410 = scalar_select %p409, %s408, 47
        %s411 = smul.addr %s410, 8
        %s412 = scalar_lea.vmem %s6, %s411
        %s413 = smul.u32 16, %s21
        %s414 = smul.u32 16, %s22
        %p415 = scmp.lt.s32.totalorder %s414, 47
        %s416 = scalar_select %p415, %s414, 47
        %s417 = smul.addr %s416, 8
        %s418 = scalar_lea.vmem %s1, %s417
        %s419 = smul.u32 16, %s22
        %s420 = smul.u32 16, %s21
        %p421 = scmp.lt.s32.totalorder %s420, 47
        %s422 = scalar_select %p421, %s420, 47
        %s423 = smul.addr %s422, 8
        %s424 = scalar_lea.vmem %s2, %s423
        %s425 = smul.u32 16, %s21
        %s426 = smul.u32 16, %s21
        %p427 = scmp.lt.s32.totalorder %s426, 47
        %s428 = scalar_select %p427, %s426, 47
        %s429 = smul.addr %s428, 8
        %s430 = scalar_lea.vmem %s3, %s429
        %s431 = smul.u32 16, %s21
        %s432 = smul.u32 16, %s21
        %p433 = scmp.lt.s32.totalorder %s432, 47
        %s434 = scalar_select %p433, %s432, 47
        %s435 = smul.addr %s434, 8
        %s436 = scalar_lea.vmem %s6, %s435
        %s437 = smul.u32 16, %s21
        %p438 = scmp.eq.s32.totalorder %s22, 0
        // Predicated region
        $region86: #{gs_forward.2} parent=80 // pred_check
          %p439 = pneg %p438
        $region87: #{gs_forward.2} parent=80 // pred_check_branch
          %441 = sbr.rel (%p439) target = $region89
        $region88: #{gs_forward.2} parent=80 // pred_region
          %442 = vst [vmem:[#allocation2] sm:$0xff] 0.0
          %443 = vst [vmem:[#allocation2 + $0x10] sm:$0xff] 0.0
          %444 = vst [vmem:[#allocation2 + $0x20] sm:$0xff] 0.0
          %445 = vst [vmem:[#allocation2 + $0x30] sm:$0xff] 0.0
          %446 = vst [vmem:[#allocation2 + $0x40] sm:$0xff] 0.0
          %447 = vst [vmem:[#allocation2 + $0x50] sm:$0xff] 0.0
          %448 = vst [vmem:[#allocation2 + $0x60] sm:$0xff] 0.0
          %449 = vst [vmem:[#allocation2 + $0x70] sm:$0xff] 0.0
          %450 = vst [vmem:[#allocation2 + $0x80] sm:$0xff] 0.0
          %451 = vst [vmem:[#allocation2 + $0x90] sm:$0xff] 0.0
          %452 = vst [vmem:[#allocation2 + $0xa0] sm:$0xff] 0.0
          %453 = vst [vmem:[#allocation2 + $0xb0] sm:$0xff] 0.0
          %454 = vst [vmem:[#allocation2 + $0xc0] sm:$0xff] 0.0
          %455 = vst [vmem:[#allocation2 + $0xd0] sm:$0xff] 0.0
          %456 = vst [vmem:[#allocation2 + $0xe0] sm:$0xff] 0.0
          %457 = vst [vmem:[#allocation2 + $0xf0] sm:$0xff] 0.0
          %v458 = vld [vmem:[%s424] sm:$0xff]
          %v459 = vld [vmem:[%s424 + $0x8] sm:$0xff]
          %v460 = vld [vmem:[%s424 + $0x10] sm:$0xff]
          %v461 = vld [vmem:[%s424 + $0x18] sm:$0xff]
          %v462 = vld [vmem:[%s424 + $0x20] sm:$0xff]
          %v463 = vld [vmem:[%s424 + $0x28] sm:$0xff]
          %v464 = vld [vmem:[%s424 + $0x30] sm:$0xff]
          %v465 = vld [vmem:[%s424 + $0x38] sm:$0xff]
          %v466 = vld [vmem:[%s424 + $0x40] sm:$0xff]
          %v467 = vld [vmem:[%s424 + $0x48] sm:$0xff]
          %v468 = vld [vmem:[%s424 + $0x50] sm:$0xff]
          %v469 = vld [vmem:[%s424 + $0x58] sm:$0xff]
          %v470 = vld [vmem:[%s424 + $0x60] sm:$0xff]
          %v471 = vld [vmem:[%s424 + $0x68] sm:$0xff]
          %v472 = vld [vmem:[%s424 + $0x70] sm:$0xff]
          %v473 = vld [vmem:[%s424 + $0x78] sm:$0xff]
          %474 = vst [vmem:[#allocation2 + $0x8] sm:$0xff] %v458
          %475 = vst [vmem:[#allocation2 + $0x18] sm:$0xff] %v459
          %476 = vst [vmem:[#allocation2 + $0x28] sm:$0xff] %v460
          %477 = vst [vmem:[#allocation2 + $0x38] sm:$0xff] %v461
          %478 = vst [vmem:[#allocation2 + $0x48] sm:$0xff] %v462
          %479 = vst [vmem:[#allocation2 + $0x58] sm:$0xff] %v463
          %480 = vst [vmem:[#allocation2 + $0x68] sm:$0xff] %v464
          %481 = vst [vmem:[#allocation2 + $0x78] sm:$0xff] %v465
          %482 = vst [vmem:[#allocation2 + $0x88] sm:$0xff] %v466
          %483 = vst [vmem:[#allocation2 + $0x98] sm:$0xff] %v467
          %484 = vst [vmem:[#allocation2 + $0xa8] sm:$0xff] %v468
          %485 = vst [vmem:[#allocation2 + $0xb8] sm:$0xff] %v469
          %486 = vst [vmem:[#allocation2 + $0xc8] sm:$0xff] %v470
          %487 = vst [vmem:[#allocation2 + $0xd8] sm:$0xff] %v471
          %488 = vst [vmem:[#allocation2 + $0xe8] sm:$0xff] %v472
          %489 = vst [vmem:[#allocation2 + $0xf8] sm:$0xff] %v473
        $region89: #{gs_forward.2} parent=80 // pred_fallthru
          _
        %v490 = vld [vmem:[#allocation2] sm:$0xff]
        %v491 = vld [vmem:[#allocation2 + $0x10] sm:$0xff]
        %v492 = vld [vmem:[#allocation2 + $0x20] sm:$0xff]
        %v493 = vld [vmem:[#allocation2 + $0x30] sm:$0xff]
        %v494 = vld [vmem:[#allocation2 + $0x40] sm:$0xff]
        %v495 = vld [vmem:[#allocation2 + $0x50] sm:$0xff]
        %v496 = vld [vmem:[#allocation2 + $0x60] sm:$0xff]
        %v497 = vld [vmem:[#allocation2 + $0x70] sm:$0xff]
        %v498 = vld [vmem:[#allocation2 + $0x80] sm:$0xff]
        %v499 = vld [vmem:[#allocation2 + $0x90] sm:$0xff]
        %v500 = vld [vmem:[#allocation2 + $0xa0] sm:$0xff]
        %v501 = vld [vmem:[#allocation2 + $0xb0] sm:$0xff]
        %v502 = vld [vmem:[#allocation2 + $0xc0] sm:$0xff]
        %v503 = vld [vmem:[#allocation2 + $0xd0] sm:$0xff]
        %v504 = vld [vmem:[#allocation2 + $0xe0] sm:$0xff]
        %v505 = vld [vmem:[#allocation2 + $0xf0] sm:$0xff]
        %v506 = vld [vmem:[%s371] sm:$0xf]
        %v507 = vld [vmem:[%s371 + $0x4] sm:$0xf]
        %v508 = vld [vmem:[%s371 + $0x8] sm:$0xf]
        %v509 = vld [vmem:[%s371 + $0xc] sm:$0xf]
        %v510 = vld [vmem:[%s371 + $0x10] sm:$0xf]
        %v511 = vld [vmem:[%s371 + $0x14] sm:$0xf]
        %v512 = vld [vmem:[%s371 + $0x18] sm:$0xf]
        %v513 = vld [vmem:[%s371 + $0x1c] sm:$0xf]
        %v514 = vld [vmem:[%s371 + $0x20] sm:$0xf]
        %v515 = vld [vmem:[%s371 + $0x24] sm:$0xf]
        %v516 = vld [vmem:[%s371 + $0x28] sm:$0xf]
        %v517 = vld [vmem:[%s371 + $0x2c] sm:$0xf]
        %v518 = vld [vmem:[%s371 + $0x30] sm:$0xf]
        %v519 = vld [vmem:[%s371 + $0x34] sm:$0xf]
        %v520 = vld [vmem:[%s371 + $0x38] sm:$0xf]
        %v521 = vld [vmem:[%s371 + $0x3c] sm:$0xf]
        %v522 = vunpack.c.l.bf16 %v506
        %v523 = vunpack.c.l.bf16 %v507
        %v524 = vunpack.c.l.bf16 %v508
        %v525 = vunpack.c.l.bf16 %v509
        %v526 = vunpack.c.l.bf16 %v510
        %v527 = vunpack.c.l.bf16 %v511
        %v528 = vunpack.c.l.bf16 %v512
        %v529 = vunpack.c.l.bf16 %v513
        %v530 = vunpack.c.l.bf16 %v514
        %v531 = vunpack.c.l.bf16 %v515
        %v532 = vunpack.c.l.bf16 %v516
        %v533 = vunpack.c.l.bf16 %v517
        %v534 = vunpack.c.l.bf16 %v518
        %v535 = vunpack.c.l.bf16 %v519
        %v536 = vunpack.c.l.bf16 %v520
        %v537 = vunpack.c.l.bf16 %v521
        %v538 = vld [vmem:[%s418] sm:$0xff]
        %v539 = vld [vmem:[%s418 + $0x8] sm:$0xff]
        %v540 = vld [vmem:[%s418 + $0x10] sm:$0xff]
        %v541 = vld [vmem:[%s418 + $0x18] sm:$0xff]
        %v542 = vld [vmem:[%s418 + $0x20] sm:$0xff]
        %v543 = vld [vmem:[%s418 + $0x28] sm:$0xff]
        %v544 = vld [vmem:[%s418 + $0x30] sm:$0xff]
        %v545 = vld [vmem:[%s418 + $0x38] sm:$0xff]
        %v546 = vld [vmem:[%s418 + $0x40] sm:$0xff]
        %v547 = vld [vmem:[%s418 + $0x48] sm:$0xff]
        %v548 = vld [vmem:[%s418 + $0x50] sm:$0xff]
        %v549 = vld [vmem:[%s418 + $0x58] sm:$0xff]
        %v550 = vld [vmem:[%s418 + $0x60] sm:$0xff]
        %v551 = vld [vmem:[%s418 + $0x68] sm:$0xff]
        %v552 = vld [vmem:[%s418 + $0x70] sm:$0xff]
        %v553 = vld [vmem:[%s418 + $0x78] sm:$0xff]
        %554 = vmatprep.subr.mxu0 0.0
        %555 = vmatpush1.msra.mxu0 %v538
        %556 = vmatprep.subr.mxu0 0.0
        %557 = vmatpush1.msra.mxu0 %v539
        %558 = vmatprep.subr.mxu0 0.0
        %559 = vmatpush1.msra.mxu0 %v540
        %560 = vmatprep.subr.mxu0 0.0
        %561 = vmatpush1.msra.mxu0 %v541
        %562 = vmatprep.subr.mxu0 0.0
        %563 = vmatpush1.msra.mxu0 %v542
        %564 = vmatprep.subr.mxu0 0.0
        %565 = vmatpush1.msra.mxu0 %v543
        %566 = vmatprep.subr.mxu0 0.0
        %567 = vmatpush1.msra.mxu0 %v544
        %568 = vmatprep.subr.mxu0 0.0
        %569 = vmatpush1.msra.mxu0 %v545
        %570 = vmatprep.subr.mxu0 0.0
        %571 = vmatpush1.msra.mxu0 %v546
        %572 = vmatprep.subr.mxu0 0.0
        %573 = vmatpush1.msra.mxu0 %v547
        %574 = vmatprep.subr.mxu0 0.0
        %575 = vmatpush1.msra.mxu0 %v548
        %576 = vmatprep.subr.mxu0 0.0
        %577 = vmatpush1.msra.mxu0 %v549
        %578 = vmatprep.subr.mxu0 0.0
        %579 = vmatpush1.msra.mxu0 %v550
        %580 = vmatprep.subr.mxu0 0.0
        %581 = vmatpush1.msra.mxu0 %v551
        %582 = vmatprep.subr.mxu0 0.0
        %583 = vmatpush1.msra.mxu0 %v552
        %584 = vmatprep.subr.mxu0 0.0
        %585 = vmatpush1.msra.mxu0 %v553
        %586 = vmatprep.subr.mxu0 0.0
        %587 = vmatpush1.msra.mxu0 0.0
        %588 = vmatprep.subr.mxu0 0.0
        %589 = vmatpush1.msra.mxu0 0.0
        %590 = vmatprep.subr.mxu0 0.0
        %591 = vmatpush1.msra.mxu0 0.0
        %592 = vmatprep.subr.mxu0 0.0
        %593 = vmatpush1.msra.mxu0 0.0
        %594 = vmatprep.subr.mxu0 0.0
        %595 = vmatpush1.msra.mxu0 0.0
        %596 = vmatprep.subr.mxu0 0.0
        %597 = vmatpush1.msra.mxu0 0.0
        %598 = vmatprep.subr.mxu0 0.0
        %599 = vmatpush1.msra.mxu0 0.0
        %600 = vmatprep.subr.mxu0 0.0
        %601 = vmatpush1.msra.mxu0 0.0
        %602 = vmatprep.subr.mxu0 0.0
        %603 = vmatpush1.msra.mxu0 0.0
        %604 = vmatprep.subr.mxu0 0.0
        %605 = vmatpush1.msra.mxu0 0.0
        %606 = vmatprep.subr.mxu0 0.0
        %607 = vmatpush1.msra.mxu0 0.0
        %608 = vmatprep.subr.mxu0 0.0
        %609 = vmatpush1.msra.mxu0 0.0
        %610 = vmatprep.subr.mxu0 0.0
        %611 = vmatpush1.msra.mxu0 0.0
        %612 = vmatprep.subr.mxu0 0.0
        %613 = vmatpush1.msra.mxu0 0.0
        %614 = vmatprep.subr.mxu0 0.0
        %615 = vmatpush1.msra.mxu0 0.0
        %616 = vmatprep.subr.mxu0 0.0
        %617 = vmatpush1.msra.mxu0 0.0
        %618 = vmatprep.mubr.f32.mxu0 0.0
        %619 = vmatmul.mubr.f32.gmra.mrb[0].mxu0 %v522
        %v620 = vpop.f32.mrb[0].mxu0
        %v621 = vadd.f32 0.0, %v620
        %v622 = vpop.f32.mrb[0].mxu0
        %623 = vmatprep.mubr.f32.mxu0 0.0
        %624 = vmatmul.mubr.f32.gmra.mrb[0].mxu0 %v523
        %v625 = vpop.f32.mrb[0].mxu0
        %v626 = vadd.f32 0.0, %v625
        %v627 = vpop.f32.mrb[0].mxu0
        %628 = vmatprep.mubr.f32.mxu0 0.0
        %629 = vmatmul.mubr.f32.gmra.mrb[0].mxu0 %v524
        %v630 = vpop.f32.mrb[0].mxu0
        %v631 = vadd.f32 0.0, %v630
        %v632 = vpop.f32.mrb[0].mxu0
        %633 = vmatprep.mubr.f32.mxu0 0.0
        %634 = vmatmul.mubr.f32.gmra.mrb[0].mxu0 %v525
        %v635 = vpop.f32.mrb[0].mxu0
        %v636 = vadd.f32 0.0, %v635
        %v637 = vpop.f32.mrb[0].mxu0
        %638 = vmatprep.mubr.f32.mxu0 0.0
        %639 = vmatmul.mubr.f32.gmra.mrb[0].mxu0 %v526
        %v640 = vpop.f32.mrb[0].mxu0
        %v641 = vadd.f32 0.0, %v640
        %v642 = vpop.f32.mrb[0].mxu0
        %643 = vmatprep.mubr.f32.mxu0 0.0
        %644 = vmatmul.mubr.f32.gmra.mrb[0].mxu0 %v527
        %v645 = vpop.f32.mrb[0].mxu0
        %v646 = vadd.f32 0.0, %v645
        %v647 = vpop.f32.mrb[0].mxu0
        %648 = vmatprep.mubr.f32.mxu0 0.0
        %649 = vmatmul.mubr.f32.gmra.mrb[0].mxu0 %v528
        %v650 = vpop.f32.mrb[0].mxu0
        %v651 = vadd.f32 0.0, %v650
        %v652 = vpop.f32.mrb[0].mxu0
        %653 = vmatprep.mubr.f32.mxu0 0.0
        %654 = vmatmul.mubr.f32.gmra.mrb[0].mxu0 %v529
        %v655 = vpop.f32.mrb[0].mxu0
        %v656 = vadd.f32 0.0, %v655
        %v657 = vpop.f32.mrb[0].mxu0
        %658 = vmatprep.mubr.f32.mxu0 0.0
        %659 = vmatmul.mubr.f32.gmra.mrb[0].mxu0 %v530
        %v660 = vpop.f32.mrb[0].mxu0
        %v661 = vadd.f32 0.0, %v660
        %v662 = vpop.f32.mrb[0].mxu0
        %663 = vmatprep.mubr.f32.mxu0 0.0
        %664 = vmatmul.mubr.f32.gmra.mrb[0].mxu0 %v531
        %v665 = vpop.f32.mrb[0].mxu0
        %v666 = vadd.f32 0.0, %v665
        %v667 = vpop.f32.mrb[0].mxu0
        %668 = vmatprep.mubr.f32.mxu0 0.0
        %669 = vmatmul.mubr.f32.gmra.mrb[0].mxu0 %v532
        %v670 = vpop.f32.mrb[0].mxu0
        %v671 = vadd.f32 0.0, %v670
        %v672 = vpop.f32.mrb[0].mxu0
        %673 = vmatprep.mubr.f32.mxu0 0.0
        %674 = vmatmul.mubr.f32.gmra.mrb[0].mxu0 %v533
        %v675 = vpop.f32.mrb[0].mxu0
        %v676 = vadd.f32 0.0, %v675
        %v677 = vpop.f32.mrb[0].mxu0
        %678 = vmatprep.mubr.f32.mxu0 0.0
        %679 = vmatmul.mubr.f32.gmra.mrb[0].mxu0 %v534
        %v680 = vpop.f32.mrb[0].mxu0
        %v681 = vadd.f32 0.0, %v680
        %v682 = vpop.f32.mrb[0].mxu0
        %683 = vmatprep.mubr.f32.mxu0 0.0
        %684 = vmatmul.mubr.f32.gmra.mrb[0].mxu0 %v535
        %v685 = vpop.f32.mrb[0].mxu0
        %v686 = vadd.f32 0.0, %v685
        %v687 = vpop.f32.mrb[0].mxu0
        %688 = vmatprep.mubr.f32.mxu0 0.0
        %689 = vmatmul.mubr.f32.gmra.mrb[0].mxu0 %v536
        %v690 = vpop.f32.mrb[0].mxu0
        %v691 = vadd.f32 0.0, %v690
        %v692 = vpop.f32.mrb[0].mxu0
        %693 = vmatprep.mubr.f32.mxu0 0.0
        %694 = vmatmul.mubr.f32.gmra.mrb[0].mxu0 %v537
        %v695 = vpop.f32.mrb[0].mxu0
        %v696 = vadd.f32 0.0, %v695
        %v697 = vpop.f32.mrb[0].mxu0
        %698 = vdwg.mxu0
        %v699 = vadd.f32 %v490, %v621
        %v700 = vadd.f32 %v491, %v626
        %v701 = vadd.f32 %v492, %v631
        %v702 = vadd.f32 %v493, %v636
        %v703 = vadd.f32 %v494, %v641
        %v704 = vadd.f32 %v495, %v646
        %v705 = vadd.f32 %v496, %v651
        %v706 = vadd.f32 %v497, %v656
        %v707 = vadd.f32 %v498, %v661
        %v708 = vadd.f32 %v499, %v666
        %v709 = vadd.f32 %v500, %v671
        %v710 = vadd.f32 %v501, %v676
        %v711 = vadd.f32 %v502, %v681
        %v712 = vadd.f32 %v503, %v686
        %v713 = vadd.f32 %v504, %v691
        %v714 = vadd.f32 %v505, %v696
        %715 = vst [vmem:[#allocation2] sm:$0xff] %v699
        %716 = vst [vmem:[#allocation2 + $0x10] sm:$0xff] %v700
        %717 = vst [vmem:[#allocation2 + $0x20] sm:$0xff] %v701
        %718 = vst [vmem:[#allocation2 + $0x30] sm:$0xff] %v702
        %719 = vst [vmem:[#allocation2 + $0x40] sm:$0xff] %v703
        %720 = vst [vmem:[#allocation2 + $0x50] sm:$0xff] %v704
        %721 = vst [vmem:[#allocation2 + $0x60] sm:$0xff] %v705
        %722 = vst [vmem:[#allocation2 + $0x70] sm:$0xff] %v706
        %723 = vst [vmem:[#allocation2 + $0x80] sm:$0xff] %v707
        %724 = vst [vmem:[#allocation2 + $0x90] sm:$0xff] %v708
        %725 = vst [vmem:[#allocation2 + $0xa0] sm:$0xff] %v709
        %726 = vst [vmem:[#allocation2 + $0xb0] sm:$0xff] %v710
        %727 = vst [vmem:[#allocation2 + $0xc0] sm:$0xff] %v711
        %728 = vst [vmem:[#allocation2 + $0xd0] sm:$0xff] %v712
        %729 = vst [vmem:[#allocation2 + $0xe0] sm:$0xff] %v713
        %730 = vst [vmem:[#allocation2 + $0xf0] sm:$0xff] %v714
        %p731 = scmp.eq.s32.totalorder %s22, 2
        // Predicated region
        $region90: #{gs_forward.2} parent=80 // pred_check
          %p732 = pneg %p731
        $region91: #{gs_forward.2} parent=80 // pred_check_branch
          %734 = sbr.rel (%p732) target = $region93
        $region92: #{gs_forward.2} parent=80 // pred_region
          %v735 = vld [vmem:[#allocation2] sm:$0xff]
          %v736 = vld [vmem:[#allocation2 + $0x10] sm:$0xff]
          %v737 = vld [vmem:[#allocation2 + $0x20] sm:$0xff]
          %v738 = vld [vmem:[#allocation2 + $0x30] sm:$0xff]
          %v739 = vld [vmem:[#allocation2 + $0x40] sm:$0xff]
          %v740 = vld [vmem:[#allocation2 + $0x50] sm:$0xff]
          %v741 = vld [vmem:[#allocation2 + $0x60] sm:$0xff]
          %v742 = vld [vmem:[#allocation2 + $0x70] sm:$0xff]
          %v743 = vld [vmem:[#allocation2 + $0x80] sm:$0xff]
          %v744 = vld [vmem:[#allocation2 + $0x90] sm:$0xff]
          %v745 = vld [vmem:[#allocation2 + $0xa0] sm:$0xff]
          %v746 = vld [vmem:[#allocation2 + $0xb0] sm:$0xff]
          %v747 = vld [vmem:[#allocation2 + $0xc0] sm:$0xff]
          %v748 = vld [vmem:[#allocation2 + $0xd0] sm:$0xff]
          %v749 = vld [vmem:[#allocation2 + $0xe0] sm:$0xff]
          %v750 = vld [vmem:[#allocation2 + $0xf0] sm:$0xff]
          %v751 = vld [vmem:[%s430] sm:$0xff]
          %v752 = vld [vmem:[%s430 + $0x8] sm:$0xff]
          %v753 = vld [vmem:[%s430 + $0x10] sm:$0xff]
          %v754 = vld [vmem:[%s430 + $0x18] sm:$0xff]
          %v755 = vld [vmem:[%s430 + $0x20] sm:$0xff]
          %v756 = vld [vmem:[%s430 + $0x28] sm:$0xff]
          %v757 = vld [vmem:[%s430 + $0x30] sm:$0xff]
          %v758 = vld [vmem:[%s430 + $0x38] sm:$0xff]
          %v759 = vld [vmem:[%s430 + $0x40] sm:$0xff]
          %v760 = vld [vmem:[%s430 + $0x48] sm:$0xff]
          %v761 = vld [vmem:[%s430 + $0x50] sm:$0xff]
          %v762 = vld [vmem:[%s430 + $0x58] sm:$0xff]
          %v763 = vld [vmem:[%s430 + $0x60] sm:$0xff]
          %v764 = vld [vmem:[%s430 + $0x68] sm:$0xff]
          %v765 = vld [vmem:[%s430 + $0x70] sm:$0xff]
          %v766 = vld [vmem:[%s430 + $0x78] sm:$0xff]
          %768 = vset.pattern.permute.xlu0 0
          %769 = vperm.xlu0 %768, %v751
          %v770 = vpop.permute.xlu0 %769
          %773 = vset.pattern.permute.xlu0 0
          %774 = vperm.xlu0 %773, %v752
          %v775 = vpop.permute.xlu0 %774
          %778 = vset.pattern.permute.xlu0 0
          %779 = vperm.xlu0 %778, %v753
          %v780 = vpop.permute.xlu0 %779
          %783 = vset.pattern.permute.xlu0 0
          %784 = vperm.xlu0 %783, %v754
          %v785 = vpop.permute.xlu0 %784
          %788 = vset.pattern.permute.xlu0 0
          %789 = vperm.xlu0 %788, %v755
          %v790 = vpop.permute.xlu0 %789
          %793 = vset.pattern.permute.xlu0 0
          %794 = vperm.xlu0 %793, %v756
          %v795 = vpop.permute.xlu0 %794
          %798 = vset.pattern.permute.xlu0 0
          %799 = vperm.xlu0 %798, %v757
          %v800 = vpop.permute.xlu0 %799
          %803 = vset.pattern.permute.xlu0 0
          %804 = vperm.xlu0 %803, %v758
          %v805 = vpop.permute.xlu0 %804
          %808 = vset.pattern.permute.xlu0 0
          %809 = vperm.xlu0 %808, %v759
          %v810 = vpop.permute.xlu0 %809
          %813 = vset.pattern.permute.xlu0 0
          %814 = vperm.xlu0 %813, %v760
          %v815 = vpop.permute.xlu0 %814
          %818 = vset.pattern.permute.xlu0 0
          %819 = vperm.xlu0 %818, %v761
          %v820 = vpop.permute.xlu0 %819
          %823 = vset.pattern.permute.xlu0 0
          %824 = vperm.xlu0 %823, %v762
          %v825 = vpop.permute.xlu0 %824
          %828 = vset.pattern.permute.xlu0 0
          %829 = vperm.xlu0 %828, %v763
          %v830 = vpop.permute.xlu0 %829
          %833 = vset.pattern.permute.xlu0 0
          %834 = vperm.xlu0 %833, %v764
          %v835 = vpop.permute.xlu0 %834
          %838 = vset.pattern.permute.xlu0 0
          %839 = vperm.xlu0 %838, %v765
          %v840 = vpop.permute.xlu0 %839
          %843 = vset.pattern.permute.xlu0 0
          %844 = vperm.xlu0 %843, %v766
          %v845 = vpop.permute.xlu0 %844
          %v847 = vmul.f32 %v735, %v770
          %v848 = vmul.f32 %v736, %v775
          %v849 = vmul.f32 %v737, %v780
          %v850 = vmul.f32 %v738, %v785
          %v851 = vmul.f32 %v739, %v790
          %v852 = vmul.f32 %v740, %v795
          %v853 = vmul.f32 %v741, %v800
          %v854 = vmul.f32 %v742, %v805
          %v855 = vmul.f32 %v743, %v810
          %v856 = vmul.f32 %v744, %v815
          %v857 = vmul.f32 %v745, %v820
          %v858 = vmul.f32 %v746, %v825
          %v859 = vmul.f32 %v747, %v830
          %v860 = vmul.f32 %v748, %v835
          %v861 = vmul.f32 %v749, %v840
          %v862 = vmul.f32 %v750, %v845
          %863 = vst [vmem:[#allocation2] sm:$0xff] %v847
          %864 = vst [vmem:[#allocation2 + $0x10] sm:$0xff] %v848
          %865 = vst [vmem:[#allocation2 + $0x20] sm:$0xff] %v849
          %866 = vst [vmem:[#allocation2 + $0x30] sm:$0xff] %v850
          %867 = vst [vmem:[#allocation2 + $0x40] sm:$0xff] %v851
          %868 = vst [vmem:[#allocation2 + $0x50] sm:$0xff] %v852
          %869 = vst [vmem:[#allocation2 + $0x60] sm:$0xff] %v853
          %870 = vst [vmem:[#allocation2 + $0x70] sm:$0xff] %v854
          %871 = vst [vmem:[#allocation2 + $0x80] sm:$0xff] %v855
          %872 = vst [vmem:[#allocation2 + $0x90] sm:$0xff] %v856
          %873 = vst [vmem:[#allocation2 + $0xa0] sm:$0xff] %v857
          %874 = vst [vmem:[#allocation2 + $0xb0] sm:$0xff] %v858
          %875 = vst [vmem:[#allocation2 + $0xc0] sm:$0xff] %v859
          %876 = vst [vmem:[#allocation2 + $0xd0] sm:$0xff] %v860
          %877 = vst [vmem:[#allocation2 + $0xe0] sm:$0xff] %v861
          %878 = vst [vmem:[#allocation2 + $0xf0] sm:$0xff] %v862
          %v879 = vld [vmem:[#allocation2] sm:$0xff]
          %v880 = vld [vmem:[#allocation2 + $0x8] sm:$0xff]
          %v881 = vld [vmem:[#allocation2 + $0x10] sm:$0xff]
          %v882 = vld [vmem:[#allocation2 + $0x18] sm:$0xff]
          %v883 = vld [vmem:[#allocation2 + $0x20] sm:$0xff]
          %v884 = vld [vmem:[#allocation2 + $0x28] sm:$0xff]
          %v885 = vld [vmem:[#allocation2 + $0x30] sm:$0xff]
          %v886 = vld [vmem:[#allocation2 + $0x38] sm:$0xff]
          %v887 = vld [vmem:[#allocation2 + $0x40] sm:$0xff]
          %v888 = vld [vmem:[#allocation2 + $0x48] sm:$0xff]
          %v889 = vld [vmem:[#allocation2 + $0x50] sm:$0xff]
          %v890 = vld [vmem:[#allocation2 + $0x58] sm:$0xff]
          %v891 = vld [vmem:[#allocation2 + $0x60] sm:$0xff]
          %v892 = vld [vmem:[#allocation2 + $0x68] sm:$0xff]
          %v893 = vld [vmem:[#allocation2 + $0x70] sm:$0xff]
          %v894 = vld [vmem:[#allocation2 + $0x78] sm:$0xff]
          %v895 = vld [vmem:[#allocation2 + $0x80] sm:$0xff]
          %v896 = vld [vmem:[#allocation2 + $0x88] sm:$0xff]
          %v897 = vld [vmem:[#allocation2 + $0x90] sm:$0xff]
          %v898 = vld [vmem:[#allocation2 + $0x98] sm:$0xff]
          %v899 = vld [vmem:[#allocation2 + $0xa0] sm:$0xff]
          %v900 = vld [vmem:[#allocation2 + $0xa8] sm:$0xff]
          %v901 = vld [vmem:[#allocation2 + $0xb0] sm:$0xff]
          %v902 = vld [vmem:[#allocation2 + $0xb8] sm:$0xff]
          %v903 = vld [vmem:[#allocation2 + $0xc0] sm:$0xff]
          %v904 = vld [vmem:[#allocation2 + $0xc8] sm:$0xff]
          %v905 = vld [vmem:[#allocation2 + $0xd0] sm:$0xff]
          %v906 = vld [vmem:[#allocation2 + $0xd8] sm:$0xff]
          %v907 = vld [vmem:[#allocation2 + $0xe0] sm:$0xff]
          %v908 = vld [vmem:[#allocation2 + $0xe8] sm:$0xff]
          %v909 = vld [vmem:[#allocation2 + $0xf0] sm:$0xff]
          %v910 = vld [vmem:[#allocation2 + $0xf8] sm:$0xff]
          %v911 = vld [vmem:[%s4] sm:$0xff]
          %v912 = vld [vmem:[%s4 + $0x8] sm:$0xff]
          %v913 = vld [vmem:[%s4 + $0x10] sm:$0xff]
          %v914 = vld [vmem:[%s4 + $0x18] sm:$0xff]
          %v915 = vld [vmem:[%s4 + $0x20] sm:$0xff]
          %v916 = vld [vmem:[%s4 + $0x28] sm:$0xff]
          %v917 = vld [vmem:[%s4 + $0x30] sm:$0xff]
          %v918 = vld [vmem:[%s4 + $0x38] sm:$0xff]
          %v919 = vld [vmem:[%s4 + $0x40] sm:$0xff]
          %v920 = vld [vmem:[%s4 + $0x48] sm:$0xff]
          %v921 = vld [vmem:[%s4 + $0x50] sm:$0xff]
          %v922 = vld [vmem:[%s4 + $0x58] sm:$0xff]
          %v923 = vld [vmem:[%s4 + $0x60] sm:$0xff]
          %v924 = vld [vmem:[%s4 + $0x68] sm:$0xff]
          %v925 = vld [vmem:[%s4 + $0x70] sm:$0xff]
          %v926 = vld [vmem:[%s4 + $0x78] sm:$0xff]
          %v927 = vld [vmem:[%s4 + $0x80] sm:$0xff]
          %v928 = vld [vmem:[%s4 + $0x88] sm:$0xff]
          %v929 = vld [vmem:[%s4 + $0x90] sm:$0xff]
          %v930 = vld [vmem:[%s4 + $0x98] sm:$0xff]
          %v931 = vld [vmem:[%s4 + $0xa0] sm:$0xff]
          %v932 = vld [vmem:[%s4 + $0xa8] sm:$0xff]
          %v933 = vld [vmem:[%s4 + $0xb0] sm:$0xff]
          %v934 = vld [vmem:[%s4 + $0xb8] sm:$0xff]
          %v935 = vld [vmem:[%s4 + $0xc0] sm:$0xff]
          %v936 = vld [vmem:[%s4 + $0xc8] sm:$0xff]
          %v937 = vld [vmem:[%s4 + $0xd0] sm:$0xff]
          %v938 = vld [vmem:[%s4 + $0xd8] sm:$0xff]
          %v939 = vld [vmem:[%s4 + $0xe0] sm:$0xff]
          %v940 = vld [vmem:[%s4 + $0xe8] sm:$0xff]
          %v941 = vld [vmem:[%s4 + $0xf0] sm:$0xff]
          %v942 = vld [vmem:[%s4 + $0xf8] sm:$0xff]
          %v943 = vld [vmem:[%s5] sm:$0x1]
          %v945 = vlaneseq
          %v946 = vshrl.u32 %v945, 7
          %v947 = vsub.s32 0, %v946
          %v948 = vrot.slane %v943, %v947
          %950 = vmatprep.subr.mxu0 0.0
          %951 = vmatpush1.msra.mxu0 %v911
          %952 = vmatprep.subr.mxu0 0.0
          %953 = vmatpush1.msra.mxu0 %v912
          %954 = vmatprep.subr.mxu0 0.0
          %955 = vmatpush1.msra.mxu0 %v913
          %956 = vmatprep.subr.mxu0 0.0
          %957 = vmatpush1.msra.mxu0 %v914
          %958 = vmatprep.subr.mxu0 0.0
          %959 = vmatpush1.msra.mxu0 %v915
          %960 = vmatprep.subr.mxu0 0.0
          %961 = vmatpush1.msra.mxu0 %v916
          %962 = vmatprep.subr.mxu0 0.0
          %963 = vmatpush1.msra.mxu0 %v917
          %964 = vmatprep.subr.mxu0 0.0
          %965 = vmatpush1.msra.mxu0 %v918
          %966 = vmatprep.subr.mxu0 0.0
          %967 = vmatpush1.msra.mxu0 %v919
          %968 = vmatprep.subr.mxu0 0.0
          %969 = vmatpush1.msra.mxu0 %v920
          %970 = vmatprep.subr.mxu0 0.0
          %971 = vmatpush1.msra.mxu0 %v921
          %972 = vmatprep.subr.mxu0 0.0
          %973 = vmatpush1.msra.mxu0 %v922
          %974 = vmatprep.subr.mxu0 0.0
          %975 = vmatpush1.msra.mxu0 %v923
          %976 = vmatprep.subr.mxu0 0.0
          %977 = vmatpush1.msra.mxu0 %v924
          %978 = vmatprep.subr.mxu0 0.0
          %979 = vmatpush1.msra.mxu0 %v925
          %980 = vmatprep.subr.mxu0 0.0
          %981 = vmatpush1.msra.mxu0 %v926
          %982 = vmatprep.subr.mxu0 0.0
          %983 = vmatpush1.msra.mxu0 %v927
          %984 = vmatprep.subr.mxu0 0.0
          %985 = vmatpush1.msra.mxu0 %v928
          %986 = vmatprep.subr.mxu0 0.0
          %987 = vmatpush1.msra.mxu0 %v929
          %988 = vmatprep.subr.mxu0 0.0
          %989 = vmatpush1.msra.mxu0 %v930
          %990 = vmatprep.subr.mxu0 0.0
          %991 = vmatpush1.msra.mxu0 %v931
          %992 = vmatprep.subr.mxu0 0.0
          %993 = vmatpush1.msra.mxu0 %v932
          %994 = vmatprep.subr.mxu0 0.0
          %995 = vmatpush1.msra.mxu0 %v933
          %996 = vmatprep.subr.mxu0 0.0
          %997 = vmatpush1.msra.mxu0 %v934
          %998 = vmatprep.subr.mxu0 0.0
          %999 = vmatpush1.msra.mxu0 %v935
          %1000 = vmatprep.subr.mxu0 0.0
          %1001 = vmatpush1.msra.mxu0 %v936
          %1002 = vmatprep.subr.mxu0 0.0
          %1003 = vmatpush1.msra.mxu0 %v937
          %1004 = vmatprep.subr.mxu0 0.0
          %1005 = vmatpush1.msra.mxu0 %v938
          %1006 = vmatprep.subr.mxu0 0.0
          %1007 = vmatpush1.msra.mxu0 %v939
          %1008 = vmatprep.subr.mxu0 0.0
          %1009 = vmatpush1.msra.mxu0 %v940
          %1010 = vmatprep.subr.mxu0 0.0
          %1011 = vmatpush1.msra.mxu0 %v941
          %1012 = vmatprep.subr.mxu0 0.0
          %1013 = vmatpush1.msra.mxu0 %v942
          %1014 = vmatprep.mubr.f32.mxu0 %v880
          %1015 = vmatmul.mubr.f32.gmra.mrb[0].mxu0 %v879
          %v1016 = vpop.f32.mrb[0].mxu0
          %v1017 = vadd.f32 %v948, %v1016
          %v1018 = vpop.f32.mrb[0].mxu0
          %1019 = vmatprep.mubr.f32.mxu0 %v882
          %1020 = vmatmul.mubr.f32.gmra.mrb[0].mxu0 %v881
          %v1021 = vpop.f32.mrb[0].mxu0
          %v1022 = vadd.f32 %v948, %v1021
          %v1023 = vpop.f32.mrb[0].mxu0
          %1024 = vmatprep.mubr.f32.mxu0 %v884
          %1025 = vmatmul.mubr.f32.gmra.mrb[0].mxu0 %v883
          %v1026 = vpop.f32.mrb[0].mxu0
          %v1027 = vadd.f32 %v948, %v1026
          %v1028 = vpop.f32.mrb[0].mxu0
          %1029 = vmatprep.mubr.f32.mxu0 %v886
          %1030 = vmatmul.mubr.f32.gmra.mrb[0].mxu0 %v885
          %v1031 = vpop.f32.mrb[0].mxu0
          %v1032 = vadd.f32 %v948, %v1031
          %v1033 = vpop.f32.mrb[0].mxu0
          %1034 = vmatprep.mubr.f32.mxu0 %v888
          %1035 = vmatmul.mubr.f32.gmra.mrb[0].mxu0 %v887
          %v1036 = vpop.f32.mrb[0].mxu0
          %v1037 = vadd.f32 %v948, %v1036
          %v1038 = vpop.f32.mrb[0].mxu0
          %1039 = vmatprep.mubr.f32.mxu0 %v890
          %1040 = vmatmul.mubr.f32.gmra.mrb[0].mxu0 %v889
          %v1041 = vpop.f32.mrb[0].mxu0
          %v1042 = vadd.f32 %v948, %v1041
          %v1043 = vpop.f32.mrb[0].mxu0
          %1044 = vmatprep.mubr.f32.mxu0 %v892
          %1045 = vmatmul.mubr.f32.gmra.mrb[0].mxu0 %v891
          %v1046 = vpop.f32.mrb[0].mxu0
          %v1047 = vadd.f32 %v948, %v1046
          %v1048 = vpop.f32.mrb[0].mxu0
          %1049 = vmatprep.mubr.f32.mxu0 %v894
          %1050 = vmatmul.mubr.f32.gmra.mrb[0].mxu0 %v893
          %v1051 = vpop.f32.mrb[0].mxu0
          %v1052 = vadd.f32 %v948, %v1051
          %v1053 = vpop.f32.mrb[0].mxu0
          %1054 = vmatprep.mubr.f32.mxu0 %v896
          %1055 = vmatmul.mubr.f32.gmra.mrb[0].mxu0 %v895
          %v1056 = vpop.f32.mrb[0].mxu0
          %v1057 = vadd.f32 %v948, %v1056
          %v1058 = vpop.f32.mrb[0].mxu0
          %1059 = vmatprep.mubr.f32.mxu0 %v898
          %1060 = vmatmul.mubr.f32.gmra.mrb[0].mxu0 %v897
          %v1061 = vpop.f32.mrb[0].mxu0
          %v1062 = vadd.f32 %v948, %v1061
          %v1063 = vpop.f32.mrb[0].mxu0
          %1064 = vmatprep.mubr.f32.mxu0 %v900
          %1065 = vmatmul.mubr.f32.gmra.mrb[0].mxu0 %v899
          %v1066 = vpop.f32.mrb[0].mxu0
          %v1067 = vadd.f32 %v948, %v1066
          %v1068 = vpop.f32.mrb[0].mxu0
          %1069 = vmatprep.mubr.f32.mxu0 %v902
          %1070 = vmatmul.mubr.f32.gmra.mrb[0].mxu0 %v901
          %v1071 = vpop.f32.mrb[0].mxu0
          %v1072 = vadd.f32 %v948, %v1071
          %v1073 = vpop.f32.mrb[0].mxu0
          %1074 = vmatprep.mubr.f32.mxu0 %v904
          %1075 = vmatmul.mubr.f32.gmra.mrb[0].mxu0 %v903
          %v1076 = vpop.f32.mrb[0].mxu0
          %v1077 = vadd.f32 %v948, %v1076
          %v1078 = vpop.f32.mrb[0].mxu0
          %1079 = vmatprep.mubr.f32.mxu0 %v906
          %1080 = vmatmul.mubr.f32.gmra.mrb[0].mxu0 %v905
          %v1081 = vpop.f32.mrb[0].mxu0
          %v1082 = vadd.f32 %v948, %v1081
          %v1083 = vpop.f32.mrb[0].mxu0
          %1084 = vmatprep.mubr.f32.mxu0 %v908
          %1085 = vmatmul.mubr.f32.gmra.mrb[0].mxu0 %v907
          %v1086 = vpop.f32.mrb[0].mxu0
          %v1087 = vadd.f32 %v948, %v1086
          %v1088 = vpop.f32.mrb[0].mxu0
          %1089 = vmatprep.mubr.f32.mxu0 %v910
          %1090 = vmatmul.mubr.f32.gmra.mrb[0].mxu0 %v909
          %v1091 = vpop.f32.mrb[0].mxu0
          %v1092 = vadd.f32 %v948, %v1091
          %v1093 = vpop.f32.mrb[0].mxu0
          %1094 = vdwg.mxu0
          %v1095 = vmax.f32 %v1017, 0.0
          %v1096 = vmax.f32 %v1022, 0.0
          %v1097 = vmax.f32 %v1027, 0.0
          %v1098 = vmax.f32 %v1032, 0.0
          %v1099 = vmax.f32 %v1037, 0.0
          %v1100 = vmax.f32 %v1042, 0.0
          %v1101 = vmax.f32 %v1047, 0.0
          %v1102 = vmax.f32 %v1052, 0.0
          %v1103 = vmax.f32 %v1057, 0.0
          %v1104 = vmax.f32 %v1062, 0.0
          %v1105 = vmax.f32 %v1067, 0.0
          %v1106 = vmax.f32 %v1072, 0.0
          %v1107 = vmax.f32 %v1077, 0.0
          %v1108 = vmax.f32 %v1082, 0.0
          %v1109 = vmax.f32 %v1087, 0.0
          %v1110 = vmax.f32 %v1092, 0.0
          %1111 = vst [vmem:[%s436] sm:$0xff] %v1095
          %1112 = vst [vmem:[%s436 + $0x8] sm:$0xff] %v1096
          %1113 = vst [vmem:[%s436 + $0x10] sm:$0xff] %v1097
          %1114 = vst [vmem:[%s436 + $0x18] sm:$0xff] %v1098
          %1115 = vst [vmem:[%s436 + $0x20] sm:$0xff] %v1099
          %1116 = vst [vmem:[%s436 + $0x28] sm:$0xff] %v1100
          %1117 = vst [vmem:[%s436 + $0x30] sm:$0xff] %v1101
          %1118 = vst [vmem:[%s436 + $0x38] sm:$0xff] %v1102
          %1119 = vst [vmem:[%s436 + $0x40] sm:$0xff] %v1103
          %1120 = vst [vmem:[%s436 + $0x48] sm:$0xff] %v1104
          %1121 = vst [vmem:[%s436 + $0x50] sm:$0xff] %v1105
          %1122 = vst [vmem:[%s436 + $0x58] sm:$0xff] %v1106
          %1123 = vst [vmem:[%s436 + $0x60] sm:$0xff] %v1107
          %1124 = vst [vmem:[%s436 + $0x68] sm:$0xff] %v1108
          %1125 = vst [vmem:[%s436 + $0x70] sm:$0xff] %v1109
          %1126 = vst [vmem:[%s436 + $0x78] sm:$0xff] %v1110
        $region93: #{gs_forward.2} parent=80 // pred_fallthru
          _
        %s1127 = smul.u32 16, %s21
        %p1128 = scmp.lt.s32.totalorder %s1127, 47
        %s1129 = scalar_select %p1128, %s1127, 47
        %s1130 = smul.addr %s1129, 8
        %s1131 = scalar_lea.vmem %s6, %s1130
        // Predicated region
        $region94: #{gs_forward.2} parent=80 // pred_check
          %p1132 = pneg %p195
        $region95: #{gs_forward.2} parent=80 // pred_check_branch
          %1134 = sbr.rel (%p1132) target = $region97
        $region96: #{gs_forward.2} parent=80 // pred_region
          %s1135 = smul.u32 16, %s21
        $region97: #{gs_forward.2} parent=80 // pred_fallthru
          _
      $region81: #{gs_forward.2} parent=5 // pred_fallthru
        _
      %p1136 = scmp.le.s32.totalorder 2, %s12
      // Predicated region
      $region98: #{gs_forward.2} parent=5 // pred_check
        %p1137 = pneg %p1136
      $region99: #{gs_forward.2} parent=5 // pred_check_branch
        %1139 = sbr.rel (%p1137) target = $region101
      $region100: #{gs_forward.2} parent=5 // pred_region
        %s1140 = ssub.s32 %s12, 2
        // Predicated region
        $region102: #{gs_forward.2} parent=100 // pred_check
          %p1141 = pneg %p201
        $region103: #{gs_forward.2} parent=100 // pred_check_branch
          %1143 = sbr.rel (%p1141) target = $region105
        $region104: #{gs_forward.2} parent=100 // pred_region
          %s1144 = smul.u32 16, %s23
          %p1145 = scmp.lt.s32.totalorder %s1144, 47
          %s1146 = scalar_select %p1145, %s1144, 47
          %s1147 = smul.addr %s1146, 8
          %s1148 = scalar_lea.vmem %s6, %s1147
        $region105: #{gs_forward.2} parent=100 // pred_fallthru
          _
      $region101: #{gs_forward.2} parent=5 // pred_fallthru
        _
    $region6: #{gs_forward.2} parent=1 // loop_footer
      %s16 = sadd.s32 1, %s12
    $region7: #{gs_forward.2} parent=1 // loop_footer_branch
      %11 = sbr.rel target = $region3
    $region8: #{gs_forward.2} parent=1 // loop_exit
      _

// kernel: gs_forward.3
$region0: #{gs_forward.3}
  #allocation0 [shape = 'u32[]', space=smem, size = 0x4, offset = 0x4, fixed_abs, tag = 'smem constant byte address 0x4 - core index']
  #allocation1 [shape = 'u32[144,128]{1,0:T(1,128)}', space=vmem, size = 0x12000, scoped, tag = 'internal scratch']
  #allocation2 [shape = 'f32[128,256]{1,0:T(8,128)}', space=vmem, size = 0x20000, scoped, tag = 'scratch operand']
  %s0 = inlined_call_operand.vmem [shape: bf16[384,384], index: 0, kind: input, shape index: {}]
  %s1 = inlined_call_operand.vmem [shape: f32[384,128], index: 1, kind: input, shape index: {}, may-alias: {1,2}]
  %s2 = inlined_call_operand.vmem [shape: f32[384,128], index: 2, kind: input, shape index: {}, may-alias: {1,2}]
  %s3 = inlined_call_operand.vmem [shape: f32[384,1], index: 3, kind: input, shape index: {}]
  %s4 = inlined_call_operand.vmem [shape: f32[256,128], index: 4, kind: input, shape index: {}]
  %s5 = inlined_call_operand.vmem [shape: f32[1,128], index: 5, kind: input, shape index: {}]
  %s6 = inlined_call_operand.vmem [shape: f32[384,128], index: 6, kind: output, shape index: {}]
  %s7 = sld [smem:[#allocation0]]
  $region106: #{gs_forward.3} parent=0
    _
  %s9 = ssub.s32 1, %s7
  %s10 = scalar_select 0, %s9, %s7
  $region1: #{gs_forward.3} parent=0
    #allocation3 [shape = 'u8[65536]{0}', space=vmem, size = 0x10000, scoped, tag = 'input window, operand 0']
    loop: start=0, step=1, limit=11
    $region2: #{gs_forward.3} parent=1 // loop_pre_header
      _
    $region3: #{gs_forward.3} parent=1 // loop_header
      %s12 = sphi 0, %s16
      %p13 = scmp.ge.s32.totalorder %s12, 11
      %s19 = sphi 0, %s31
      %s20 = sphi 0, %s27
      %s21 = sphi 0, %s19
      %s22 = sphi 0, %s20
      %s23 = sphi 0, %s21
      %s24 = sphi 0, %s22
      %s36 = sphi 0, %s38
      %s39 = sphi 0, %s36
      %s40 = sphi 0, %s39
      %s56 = sphi 0, %s40
      %s62 = sphi 0, %s64
      %s65 = sphi 0, %s62
      %s66 = sphi 0, %s65
      %s82 = sphi 0, %s66
      %s88 = sphi 0, %s90
      %s91 = sphi 0, %s88
      %s92 = sphi 0, %s91
      %s108 = sphi 0, %s92
      %s114 = sphi 0, %s116
      %s117 = sphi 0, %s114
      %s118 = sphi 0, %s117
      %s134 = sphi 0, %s118
      %s138 = sphi 0, %s138
      %s140 = sphi 0, %s138
      %s141 = sphi 0, %s140
      %s155 = sphi 0, %s141
      %s159 = sphi 0, %s159
      %s161 = sphi 0, %s159
      %s162 = sphi 0, %s161
      %s176 = sphi 0, %s162
      %s182 = sphi 0, %s184
      %s185 = sphi 0, %s182
      %s186 = sphi 0, %s185
      %s202 = sphi 0, %s186
    $region4: #{gs_forward.3} parent=1 // loop_header_branch
      %15 = sbr.rel (%p13) target = $region8
    $region5: #{gs_forward.3} parent=1 // loop_body
      %s17 = ssub.s32 %s12, 1
      %s18 = ssub.s32 %s12, 2
      %s25 = sadd.s32 1, %s20
      %p26 = scmp.ge.s32.totalorder %s25, 3
      %s27 = scalar_select %p26, 0, %s25
      %s28 = sadd.s32 1, %s19
      %s29 = scalar_select %p26, %s28, %s19
      %p30 = scmp.ge.s32.totalorder %s29, 3
      %s31 = scalar_select %p30, 0, %s29
      %s32 = ssub.s32 %s19, %s31
      %s33 = ssub.s32 %s20, %s27
      %s34 = sor.u32 %s32, %s33
      %p35 = scmp.eq.s32.totalorder %s34, 0
      %s37 = sadd.s32 %s36, 1
      %s38 = scalar_select %p35, %s36, %s37
      %p41 = pneg %p35
      %p42 = scmp.eq.s32.totalorder %s12, 8
      %p43 = por %p41, %p42
      %p44 = scmp.ne.s32.totalorder %s36, %s39
      %p45 = scmp.eq.s32.totalorder %s12, 0
      %p46 = por %p44, %p45
      %p47 = scmp.ne.s32.totalorder %s36, %s39
      %p48 = scmp.eq.s32.totalorder %s17, 8
      %p49 = por %p47, %p48
      %p50 = scmp.ne.s32.totalorder %s39, %s40
      %p51 = scmp.eq.s32.totalorder %s17, 0
      %p52 = por %p50, %p51
      %p53 = scmp.ne.s32.totalorder %s39, %s40
      %p54 = scmp.eq.s32.totalorder %s18, 8
      %p55 = por %p53, %p54
      %p57 = scmp.ne.s32.totalorder %s40, %s56
      %p58 = scmp.eq.s32.totalorder %s18, 0
      %p59 = por %p57, %p58
      %s60 = ssub.s32 %s20, %s27
      %p61 = scmp.eq.s32.totalorder %s60, 0
      %s63 = sadd.s32 %s62, 1
      %s64 = scalar_select %p61, %s62, %s63
      %p67 = pneg %p61
      %p68 = scmp.eq.s32.totalorder %s12, 8
      %p69 = por %p67, %p68
      %p70 = scmp.ne.s32.totalorder %s62, %s65
      %p71 = scmp.eq.s32.totalorder %s12, 0
      %p72 = por %p70, %p71
      %p73 = scmp.ne.s32.totalorder %s62, %s65
      %p74 = scmp.eq.s32.totalorder %s17, 8
      %p75 = por %p73, %p74
      %p76 = scmp.ne.s32.totalorder %s65, %s66
      %p77 = scmp.eq.s32.totalorder %s17, 0
      %p78 = por %p76, %p77
      %p79 = scmp.ne.s32.totalorder %s65, %s66
      %p80 = scmp.eq.s32.totalorder %s18, 8
      %p81 = por %p79, %p80
      %p83 = scmp.ne.s32.totalorder %s66, %s82
      %p84 = scmp.eq.s32.totalorder %s18, 0
      %p85 = por %p83, %p84
      %s86 = ssub.s32 %s19, %s31
      %p87 = scmp.eq.s32.totalorder %s86, 0
      %s89 = sadd.s32 %s88, 1
      %s90 = scalar_select %p87, %s88, %s89
      %p93 = pneg %p87
      %p94 = scmp.eq.s32.totalorder %s12, 8
      %p95 = por %p93, %p94
      %p96 = scmp.ne.s32.totalorder %s88, %s91
      %p97 = scmp.eq.s32.totalorder %s12, 0
      %p98 = por %p96, %p97
      %p99 = scmp.ne.s32.totalorder %s88, %s91
      %p100 = scmp.eq.s32.totalorder %s17, 8
      %p101 = por %p99, %p100
      %p102 = scmp.ne.s32.totalorder %s91, %s92
      %p103 = scmp.eq.s32.totalorder %s17, 0
      %p104 = por %p102, %p103
      %p105 = scmp.ne.s32.totalorder %s91, %s92
      %p106 = scmp.eq.s32.totalorder %s18, 8
      %p107 = por %p105, %p106
      %p109 = scmp.ne.s32.totalorder %s92, %s108
      %p110 = scmp.eq.s32.totalorder %s18, 0
      %p111 = por %p109, %p110
      %s112 = ssub.s32 %s19, %s31
      %p113 = scmp.eq.s32.totalorder %s112, 0
      %s115 = sadd.s32 %s114, 1
      %s116 = scalar_select %p113, %s114, %s115
      %p119 = pneg %p113
      %p120 = scmp.eq.s32.totalorder %s12, 8
      %p121 = por %p119, %p120
      %p122 = scmp.ne.s32.totalorder %s114, %s117
      %p123 = scmp.eq.s32.totalorder %s12, 0
      %p124 = por %p122, %p123
      %p125 = scmp.ne.s32.totalorder %s114, %s117
      %p126 = scmp.eq.s32.totalorder %s17, 8
      %p127 = por %p125, %p126
      %p128 = scmp.ne.s32.totalorder %s117, %s118
      %p129 = scmp.eq.s32.totalorder %s17, 0
      %p130 = por %p128, %p129
      %p131 = scmp.ne.s32.totalorder %s117, %s118
      %p132 = scmp.eq.s32.totalorder %s18, 8
      %p133 = por %p131, %p132
      %p135 = scmp.ne.s32.totalorder %s118, %s134
      %p136 = scmp.eq.s32.totalorder %s18, 0
      %p137 = por %p135, %p136
      %s139 = sadd.s32 %s138, 1
      %p142 = scmp.eq.s32.totalorder %s12, 8
      %p143 = scmp.ne.s32.totalorder %s138, %s140
      %p144 = scmp.eq.s32.totalorder %s12, 0
      %p145 = por %p143, %p144
      %p146 = scmp.ne.s32.totalorder %s138, %s140
      %p147 = scmp.eq.s32.totalorder %s17, 8
      %p148 = por %p146, %p147
      %p149 = scmp.ne.s32.totalorder %s140, %s141
      %p150 = scmp.eq.s32.totalorder %s17, 0
      %p151 = por %p149, %p150
      %p152 = scmp.ne.s32.totalorder %s140, %s141
      %p153 = scmp.eq.s32.totalorder %s18, 8
      %p154 = por %p152, %p153
      %p156 = scmp.ne.s32.totalorder %s141, %s155
      %p157 = scmp.eq.s32.totalorder %s18, 0
      %p158 = por %p156, %p157
      %s160 = sadd.s32 %s159, 1
      %p163 = scmp.eq.s32.totalorder %s12, 8
      %p164 = scmp.ne.s32.totalorder %s159, %s161
      %p165 = scmp.eq.s32.totalorder %s12, 0
      %p166 = por %p164, %p165
      %p167 = scmp.ne.s32.totalorder %s159, %s161
      %p168 = scmp.eq.s32.totalorder %s17, 8
      %p169 = por %p167, %p168
      %p170 = scmp.ne.s32.totalorder %s161, %s162
      %p171 = scmp.eq.s32.totalorder %s17, 0
      %p172 = por %p170, %p171
      %p173 = scmp.ne.s32.totalorder %s161, %s162
      %p174 = scmp.eq.s32.totalorder %s18, 8
      %p175 = por %p173, %p174
      %p177 = scmp.ne.s32.totalorder %s162, %s176
      %p178 = scmp.eq.s32.totalorder %s18, 0
      %p179 = por %p177, %p178
      %s180 = ssub.s32 %s19, %s31
      %p181 = scmp.eq.s32.totalorder %s180, 0
      %s183 = sadd.s32 %s182, 1
      %s184 = scalar_select %p181, %s182, %s183
      %p187 = pneg %p181
      %p188 = scmp.eq.s32.totalorder %s12, 8
      %p189 = por %p187, %p188
      %p190 = scmp.ne.s32.totalorder %s182, %s185
      %p191 = scmp.eq.s32.totalorder %s12, 0
      %p192 = por %p190, %p191
      %p193 = scmp.ne.s32.totalorder %s182, %s185
      %p194 = scmp.eq.s32.totalorder %s17, 8
      %p195 = por %p193, %p194
      %p196 = scmp.ne.s32.totalorder %s185, %s186
      %p197 = scmp.eq.s32.totalorder %s17, 0
      %p198 = por %p196, %p197
      %p199 = scmp.ne.s32.totalorder %s185, %s186
      %p200 = scmp.eq.s32.totalorder %s18, 8
      %p201 = por %p199, %p200
      %p203 = scmp.ne.s32.totalorder %s186, %s202
      %p204 = scmp.eq.s32.totalorder %s18, 0
      %p205 = por %p203, %p204
      %p206 = scmp.le.s32.totalorder 1, %s12
      %p207 = scmp.lt.s32.totalorder %s12, 10
      %p208 = pnand %p206, %p207
      %p209 = pneg %p208
      // Predicated region
      $region9: #{gs_forward.3} parent=5 // pred_check
        _
      $region10: #{gs_forward.3} parent=5 // pred_check_branch
        %211 = sbr.rel (%p208) target = $region12
      $region11: #{gs_forward.3} parent=5 // pred_region
        %s212 = ssub.s32 %s12, 1
        // Predicated region
        $region13: #{gs_forward.3} parent=11 // pred_check
          %p213 = pneg %p151
        $region14: #{gs_forward.3} parent=11 // pred_check_branch
          %215 = sbr.rel (%p213) target = $region16
        $region15: #{gs_forward.3} parent=11 // pred_region
          _
        $region16: #{gs_forward.3} parent=11 // pred_fallthru
          _
        // Predicated region
        $region17: #{gs_forward.3} parent=11 // pred_check
          %p216 = pneg %p172
        $region18: #{gs_forward.3} parent=11 // pred_check_branch
          %218 = sbr.rel (%p216) target = $region20
        $region19: #{gs_forward.3} parent=11 // pred_region
          _
        $region20: #{gs_forward.3} parent=11 // pred_fallthru
          _
      $region12: #{gs_forward.3} parent=5 // pred_fallthru
        _
      %p219 = scmp.lt.s32.totalorder %s12, 9
      // Predicated region
      $region21: #{gs_forward.3} parent=5 // pred_check
        %p220 = pneg %p219
      $region22: #{gs_forward.3} parent=5 // pred_check_branch
        %222 = sbr.rel (%p220) target = $region24
      $region23: #{gs_forward.3} parent=5 // pred_region
        // Predicated region
        $region25: #{gs_forward.3} parent=23 // pred_check
          %p223 = pneg %p46
        $region26: #{gs_forward.3} parent=23 // pred_check_branch
          %225 = sbr.rel (%p223) target = $region28
        $region27: #{gs_forward.3} parent=23 // pred_region
          %s226 = sand.u32 %s36, 1
          %s227 = sand.u32 %s36, 1
          %s228 = smul.addr %s227, 64
          %s229 = scalar_lea.vmem [#allocation3], %s228
          %s230 = smul.u32 16, %s19
          %s231 = smul.addr %s230, 3
          %s232 = sadd.s32 %s20, %s231
          %s233 = smul.addr %s232, 4
          %s234 = scalar_lea.vmem %s0, %s233
          // Predicated region
          $region29: #{gs_forward.3} parent=27 // pred_check
            _
          $region30: #{gs_forward.3} parent=27 // pred_check_branch
            %236 = sbr.rel (0) target = $region32
          $region31: #{gs_forward.3} parent=27 // pred_region
            // Predicated region
            $region33: #{gs_forward.3} parent=31 // pred_check
              _
            $region34: #{gs_forward.3} parent=31 // pred_check_branch
              %238 = sbr.rel target = $region36
            $region35: #{gs_forward.3} parent=31 // pred_region
              // Predicated region
              $region48: #{gs_forward.3} parent=35 // pred_check
                _
              $region49: #{gs_forward.3} parent=35 // pred_check_branch
                %283 = sbr.rel (0) target = $region51
              $region50: #{gs_forward.3} parent=35 // pred_region
                loop: start=0, step=1, limit=1
                $region52: #{gs_forward.3} parent=50 // loop_pre_header
                  _
                $region53: #{gs_forward.3} parent=50 // loop_header
                  %s285 = sphi 0, %s289
                  %p286 = scmp.ge.s32.totalorder %s285, 1
                  %s290 = sphi %s234, %s234
                  %s291 = sphi %s229, %s229
                $region54: #{gs_forward.3} parent=50 // loop_header_branch
                  %288 = sbr.rel (%p286) target = $region58
                $region55: #{gs_forward.3} parent=50 // loop_body
                  _
                $region56: #{gs_forward.3} parent=50 // loop_footer
                  %s289 = sadd.s32 1, %s285
                $region57: #{gs_forward.3} parent=50 // loop_footer_branch
                  %284 = sbr.rel target = $region53
                $region58: #{gs_forward.3} parent=50 // loop_exit
                  _
                loop: start=0, step=1, limit=1
                $region59: #{gs_forward.3} parent=50 // loop_pre_header
                  _
                $region60: #{gs_forward.3} parent=50 // loop_header
                  %s294 = sphi 0, %s298
                  %p295 = scmp.ge.s32.totalorder %s294, 1
                  %s299 = sphi %s234, %s234
                  %s300 = sphi %s229, %s229
                $region61: #{gs_forward.3} parent=50 // loop_header_branch
                  %297 = sbr.rel (%p295) target = $region65
                $region62: #{gs_forward.3} parent=50 // loop_body
                  %v301 = vld [vmem:[%s299] sm:$0xf]
                  %302 = vst [vmem:[%s300] sm:$0xf] %v301
                  %v303 = vld [vmem:[%s299 + $0xc] sm:$0xf]
                  %304 = vst [vmem:[%s300 + $0x4] sm:$0xf] %v303
                  %v305 = vld [vmem:[%s299 + $0x18] sm:$0xf]
                  %306 = vst [vmem:[%s300 + $0x8] sm:$0xf] %v305
                  %v307 = vld [vmem:[%s299 + $0x24] sm:$0xf]
                  %308 = vst [vmem:[%s300 + $0xc] sm:$0xf] %v307
                  %v309 = vld [vmem:[%s299 + $0x30] sm:$0xf]
                  %310 = vst [vmem:[%s300 + $0x10] sm:$0xf] %v309
                  %v311 = vld [vmem:[%s299 + $0x3c] sm:$0xf]
                  %312 = vst [vmem:[%s300 + $0x14] sm:$0xf] %v311
                  %v313 = vld [vmem:[%s299 + $0x48] sm:$0xf]
                  %314 = vst [vmem:[%s300 + $0x18] sm:$0xf] %v313
                  %v315 = vld [vmem:[%s299 + $0x54] sm:$0xf]
                  %316 = vst [vmem:[%s300 + $0x1c] sm:$0xf] %v315
                  %v317 = vld [vmem:[%s299 + $0x60] sm:$0xf]
                  %318 = vst [vmem:[%s300 + $0x20] sm:$0xf] %v317
                  %v319 = vld [vmem:[%s299 + $0x6c] sm:$0xf]
                  %320 = vst [vmem:[%s300 + $0x24] sm:$0xf] %v319
                  %v321 = vld [vmem:[%s299 + $0x78] sm:$0xf]
                  %322 = vst [vmem:[%s300 + $0x28] sm:$0xf] %v321
                  %v323 = vld [vmem:[%s299 + $0x84] sm:$0xf]
                  %324 = vst [vmem:[%s300 + $0x2c] sm:$0xf] %v323
                  %v325 = vld [vmem:[%s299 + $0x90] sm:$0xf]
                  %326 = vst [vmem:[%s300 + $0x30] sm:$0xf] %v325
                  %v327 = vld [vmem:[%s299 + $0x9c] sm:$0xf]
                  %328 = vst [vmem:[%s300 + $0x34] sm:$0xf] %v327
                  %v329 = vld [vmem:[%s299 + $0xa8] sm:$0xf]
                  %330 = vst [vmem:[%s300 + $0x38] sm:$0xf] %v329
                  %v331 = vld [vmem:[%s299 + $0xb4] sm:$0xf]
                  %332 = vst [vmem:[%s300 + $0x3c] sm:$0xf] %v331
                $region63: #{gs_forward.3} parent=50 // loop_footer
                  %s298 = sadd.s32 1, %s294
                $region64: #{gs_forward.3} parent=50 // loop_footer_branch
                  %293 = sbr.rel target = $region60
                $region65: #{gs_forward.3} parent=50 // loop_exit
                  _
              $region51: #{gs_forward.3} parent=35 // pred_fallthru
                _
            $region36: #{gs_forward.3} parent=31 // pred_fallthru
              _
            // Predicated region
            $region37: #{gs_forward.3} parent=31 // pred_check
              _
            $region38: #{gs_forward.3} parent=31 // pred_check_branch
              %240 = sbr.rel (0) target = $region40
            $region39: #{gs_forward.3} parent=31 // pred_region
              loop: start=0, step=1, limit=1
              $region41: #{gs_forward.3} parent=39 // loop_pre_header
                _
              $region42: #{gs_forward.3} parent=39 // loop_header
                %s243 = sphi 0, %s247
                %p244 = scmp.ge.s32.totalorder %s243, 1
                %s248 = sphi %s234, %s234
                %s249 = sphi %s229, %s229
              $region43: #{gs_forward.3} parent=39 // loop_header_branch
                %246 = sbr.rel (%p244) target = $region47
              $region44: #{gs_forward.3} parent=39 // loop_body
                %v250 = vld [vmem:[%s248] sm:$0xf]
                %251 = vst [vmem:[%s249] sm:$0xf] %v250
                %v252 = vld [vmem:[%s248 + $0xc] sm:$0xf]
                %253 = vst [vmem:[%s249 + $0x4] sm:$0xf] %v252
                %v254 = vld [vmem:[%s248 + $0x18] sm:$0xf]
                %255 = vst [vmem:[%s249 + $0x8] sm:$0xf] %v254
                %v256 = vld [vmem:[%s248 + $0x24] sm:$0xf]
                %257 = vst [vmem:[%s249 + $0xc] sm:$0xf] %v256
                %v258 = vld [vmem:[%s248 + $0x30] sm:$0xf]
                %259 = vst [vmem:[%s249 + $0x10] sm:$0xf] %v258
                %v260 = vld [vmem:[%s248 + $0x3c] sm:$0xf]
                %261 = vst [vmem:[%s249 + $0x14] sm:$0xf] %v260
                %v262 = vld [vmem:[%s248 + $0x48] sm:$0xf]
                %263 = vst [vmem:[%s249 + $0x18] sm:$0xf] %v262
                %v264 = vld [vmem:[%s248 + $0x54] sm:$0xf]
                %265 = vst [vmem:[%s249 + $0x1c] sm:$0xf] %v264
                %v266 = vld [vmem:[%s248 + $0x60] sm:$0xf]
                %267 = vst [vmem:[%s249 + $0x20] sm:$0xf] %v266
                %v268 = vld [vmem:[%s248 + $0x6c] sm:$0xf]
                %269 = vst [vmem:[%s249 + $0x24] sm:$0xf] %v268
                %v270 = vld [vmem:[%s248 + $0x78] sm:$0xf]
                %271 = vst [vmem:[%s249 + $0x28] sm:$0xf] %v270
                %v272 = vld [vmem:[%s248 + $0x84] sm:$0xf]
                %273 = vst [vmem:[%s249 + $0x2c] sm:$0xf] %v272
                %v274 = vld [vmem:[%s248 + $0x90] sm:$0xf]
                %275 = vst [vmem:[%s249 + $0x30] sm:$0xf] %v274
                %v276 = vld [vmem:[%s248 + $0x9c] sm:$0xf]
                %277 = vst [vmem:[%s249 + $0x34] sm:$0xf] %v276
                %v278 = vld [vmem:[%s248 + $0xa8] sm:$0xf]
                %279 = vst [vmem:[%s249 + $0x38] sm:$0xf] %v278
                %v280 = vld [vmem:[%s248 + $0xb4] sm:$0xf]
                %281 = vst [vmem:[%s249 + $0x3c] sm:$0xf] %v280
              $region45: #{gs_forward.3} parent=39 // loop_footer
                %s247 = sadd.s32 1, %s243
              $region46: #{gs_forward.3} parent=39 // loop_footer_branch
                %242 = sbr.rel target = $region42
              $region47: #{gs_forward.3} parent=39 // loop_exit
                _
            $region40: #{gs_forward.3} parent=31 // pred_fallthru
              _
          $region32: #{gs_forward.3} parent=27 // pred_fallthru
            _
          %333 = vnop
        $region28: #{gs_forward.3} parent=23 // pred_fallthru
          _
        // Predicated region
        $region66: #{gs_forward.3} parent=23 // pred_check
          %p334 = pneg %p72
        $region67: #{gs_forward.3} parent=23 // pred_check_branch
          %336 = sbr.rel (%p334) target = $region69
        $region68: #{gs_forward.3} parent=23 // pred_region
          %s337 = smul.u32 16, %s20
          %p338 = scmp.lt.s32.totalorder %s337, 47
          %s339 = scalar_select %p338, %s337, 47
          %s340 = smul.addr %s339, 8
          %s341 = scalar_lea.vmem %s1, %s340
          %s342 = smul.u32 16, %s20
        $region69: #{gs_forward.3} parent=23 // pred_fallthru
          _
        // Predicated region
        $region70: #{gs_forward.3} parent=23 // pred_check
          %p343 = pneg %p98
        $region71: #{gs_forward.3} parent=23 // pred_check_branch
          %345 = sbr.rel (%p343) target = $region73
        $region72: #{gs_forward.3} parent=23 // pred_region
          %s346 = smul.u32 16, %s19
          %p347 = scmp.lt.s32.totalorder %s346, 47
          %s348 = scalar_select %p347, %s346, 47
          %s349 = smul.addr %s348, 8
          %s350 = scalar_lea.vmem %s2, %s349
          %s351 = smul.u32 16, %s19
        $region73: #{gs_forward.3} parent=23 // pred_fallthru
          _
        // Predicated region
        $region74: #{gs_forward.3} parent=23 // pred_check
          %p352 = pneg %p124
        $region75: #{gs_forward.3} parent=23 // pred_check_branch
          %354 = sbr.rel (%p352) target = $region77
        $region76: #{gs_forward.3} parent=23 // pred_region
          %s355 = smul.u32 16, %s19
          %p356 = scmp.lt.s32.totalorder %s355, 47
          %s357 = scalar_select %p356, %s355, 47
          %s358 = smul.addr %s357, 8
          %s359 = scalar_lea.vmem %s3, %s358
          %s360 = smul.u32 16, %s19
        $region77: #{gs_forward.3} parent=23 // pred_fallthru
          _
      $region24: #{gs_forward.3} parent=5 // pred_fallthru
        _
      %p361 = scmp.le.s32.totalorder 1, %s12
      %p362 = scmp.lt.s32.totalorder %s12, 10
      %p363 = pnand %p361, %p362
      %p364 = pneg %p363
      // Predicated region
      $region78: #{gs_forward.3} parent=5 // pred_check
        _
      $region79: #{gs_forward.3} parent=5 // pred_check_branch
        %366 = sbr.rel (%p363) target = $region81
      $region80: #{gs_forward.3} parent=5 // pred_region
        %s367 = ssub.s32 %s12, 1
        %s368 = sand.u32 %s39, 1
        %s369 = sand.u32 %s39, 1
        %s370 = smul.addr %s369, 64
        %s371 = scalar_lea.vmem [#allocation3], %s370
        // Predicated region
        $region82: #{gs_forward.3} parent=80 // pred_check
          %p372 = pneg %p52
        $region83: #{gs_forward.3} parent=80 // pred_check_branch
          %374 = sbr.rel (%p372) target = $region85
        $region84: #{gs_forward.3} parent=80 // pred_region
          _
        $region85: #{gs_forward.3} parent=80 // pred_fallthru
          _
        %s375 = sand.u32 %s39, 1
        %s376 = sand.u32 %s39, 1
        %s377 = smul.addr %s376, 64
        %s378 = scalar_lea.vmem [#allocation3], %s377
        %p379 = pneg %p52
        %p380 = pneg %p49
        %s381 = smul.u32 16, %s22
        %p382 = scmp.lt.s32.totalorder %s381, 47
        %s383 = scalar_select %p382, %s381, 47
        %s384 = smul.addr %s383, 8
        %s385 = scalar_lea.vmem %s1, %s384
        %p386 = pneg %p78
        %p387 = pneg %p75
        %s388 = smul.u32 16, %s21
        %p389 = scmp.lt.s32.totalorder %s388, 47
        %s390 = scalar_select %p389, %s388, 47
        %s391 = smul.addr %s390, 8
        %s392 = scalar_lea.vmem %s2, %s391
        %p393 = pneg %p104
        %p394 = pneg %p101
        %s395 = smul.u32 16, %s21
        %p396 = scmp.lt.s32.totalorder %s395, 47
        %s397 = scalar_select %p396, %s395, 47
        %s398 = smul.addr %s397, 8
        %s399 = scalar_lea.vmem %s3, %s398
        %p400 = pneg %p130
        %p401 = pneg %p127
        %p402 = pneg %p151
        %p403 = pneg %p148
        %p404 = pneg %p172
        %p405 = pneg %p169
        %p406 = pneg %p198
        %p407 = pneg %p195
        %s408 = smul.u32 16, %s21
        %p409 = scmp.lt.s32.totalorder %s408, 47
        %s410 = scalar_select %p409, %s408, 47
        %s411 = smul.addr %s410, 8
        %s412 = scalar_lea.vmem %s6, %s411
        %s413 = smul.u32 16, %s21
        %s414 = smul.u32 16, %s22
        %p415 = scmp.lt.s32.totalorder %s414, 47
        %s416 = scalar_select %p415, %s414, 47
        %s417 = smul.addr %s416, 8
        %s418 = scalar_lea.vmem %s1, %s417
        %s419 = smul.u32 16, %s22
        %s420 = smul.u32 16, %s21
        %p421 = scmp.lt.s32.totalorder %s420, 47
        %s422 = scalar_select %p421, %s420, 47
        %s423 = smul.addr %s422, 8
        %s424 = scalar_lea.vmem %s2, %s423
        %s425 = smul.u32 16, %s21
        %s426 = smul.u32 16, %s21
        %p427 = scmp.lt.s32.totalorder %s426, 47
        %s428 = scalar_select %p427, %s426, 47
        %s429 = smul.addr %s428, 8
        %s430 = scalar_lea.vmem %s3, %s429
        %s431 = smul.u32 16, %s21
        %s432 = smul.u32 16, %s21
        %p433 = scmp.lt.s32.totalorder %s432, 47
        %s434 = scalar_select %p433, %s432, 47
        %s435 = smul.addr %s434, 8
        %s436 = scalar_lea.vmem %s6, %s435
        %s437 = smul.u32 16, %s21
        %p438 = scmp.eq.s32.totalorder %s22, 0
        // Predicated region
        $region86: #{gs_forward.3} parent=80 // pred_check
          %p439 = pneg %p438
        $region87: #{gs_forward.3} parent=80 // pred_check_branch
          %441 = sbr.rel (%p439) target = $region89
        $region88: #{gs_forward.3} parent=80 // pred_region
          %442 = vst [vmem:[#allocation2] sm:$0xff] 0.0
          %443 = vst [vmem:[#allocation2 + $0x10] sm:$0xff] 0.0
          %444 = vst [vmem:[#allocation2 + $0x20] sm:$0xff] 0.0
          %445 = vst [vmem:[#allocation2 + $0x30] sm:$0xff] 0.0
          %446 = vst [vmem:[#allocation2 + $0x40] sm:$0xff] 0.0
          %447 = vst [vmem:[#allocation2 + $0x50] sm:$0xff] 0.0
          %448 = vst [vmem:[#allocation2 + $0x60] sm:$0xff] 0.0
          %449 = vst [vmem:[#allocation2 + $0x70] sm:$0xff] 0.0
          %450 = vst [vmem:[#allocation2 + $0x80] sm:$0xff] 0.0
          %451 = vst [vmem:[#allocation2 + $0x90] sm:$0xff] 0.0
          %452 = vst [vmem:[#allocation2 + $0xa0] sm:$0xff] 0.0
          %453 = vst [vmem:[#allocation2 + $0xb0] sm:$0xff] 0.0
          %454 = vst [vmem:[#allocation2 + $0xc0] sm:$0xff] 0.0
          %455 = vst [vmem:[#allocation2 + $0xd0] sm:$0xff] 0.0
          %456 = vst [vmem:[#allocation2 + $0xe0] sm:$0xff] 0.0
          %457 = vst [vmem:[#allocation2 + $0xf0] sm:$0xff] 0.0
          %v458 = vld [vmem:[%s424] sm:$0xff]
          %v459 = vld [vmem:[%s424 + $0x8] sm:$0xff]
          %v460 = vld [vmem:[%s424 + $0x10] sm:$0xff]
          %v461 = vld [vmem:[%s424 + $0x18] sm:$0xff]
          %v462 = vld [vmem:[%s424 + $0x20] sm:$0xff]
          %v463 = vld [vmem:[%s424 + $0x28] sm:$0xff]
          %v464 = vld [vmem:[%s424 + $0x30] sm:$0xff]
          %v465 = vld [vmem:[%s424 + $0x38] sm:$0xff]
          %v466 = vld [vmem:[%s424 + $0x40] sm:$0xff]
          %v467 = vld [vmem:[%s424 + $0x48] sm:$0xff]
          %v468 = vld [vmem:[%s424 + $0x50] sm:$0xff]
          %v469 = vld [vmem:[%s424 + $0x58] sm:$0xff]
          %v470 = vld [vmem:[%s424 + $0x60] sm:$0xff]
          %v471 = vld [vmem:[%s424 + $0x68] sm:$0xff]
          %v472 = vld [vmem:[%s424 + $0x70] sm:$0xff]
          %v473 = vld [vmem:[%s424 + $0x78] sm:$0xff]
          %474 = vst [vmem:[#allocation2 + $0x8] sm:$0xff] %v458
          %475 = vst [vmem:[#allocation2 + $0x18] sm:$0xff] %v459
          %476 = vst [vmem:[#allocation2 + $0x28] sm:$0xff] %v460
          %477 = vst [vmem:[#allocation2 + $0x38] sm:$0xff] %v461
          %478 = vst [vmem:[#allocation2 + $0x48] sm:$0xff] %v462
          %479 = vst [vmem:[#allocation2 + $0x58] sm:$0xff] %v463
          %480 = vst [vmem:[#allocation2 + $0x68] sm:$0xff] %v464
          %481 = vst [vmem:[#allocation2 + $0x78] sm:$0xff] %v465
          %482 = vst [vmem:[#allocation2 + $0x88] sm:$0xff] %v466
          %483 = vst [vmem:[#allocation2 + $0x98] sm:$0xff] %v467
          %484 = vst [vmem:[#allocation2 + $0xa8] sm:$0xff] %v468
          %485 = vst [vmem:[#allocation2 + $0xb8] sm:$0xff] %v469
          %486 = vst [vmem:[#allocation2 + $0xc8] sm:$0xff] %v470
          %487 = vst [vmem:[#allocation2 + $0xd8] sm:$0xff] %v471
          %488 = vst [vmem:[#allocation2 + $0xe8] sm:$0xff] %v472
          %489 = vst [vmem:[#allocation2 + $0xf8] sm:$0xff] %v473
        $region89: #{gs_forward.3} parent=80 // pred_fallthru
          _
        %v490 = vld [vmem:[#allocation2] sm:$0xff]
        %v491 = vld [vmem:[#allocation2 + $0x10] sm:$0xff]
        %v492 = vld [vmem:[#allocation2 + $0x20] sm:$0xff]
        %v493 = vld [vmem:[#allocation2 + $0x30] sm:$0xff]
        %v494 = vld [vmem:[#allocation2 + $0x40] sm:$0xff]
        %v495 = vld [vmem:[#allocation2 + $0x50] sm:$0xff]
        %v496 = vld [vmem:[#allocation2 + $0x60] sm:$0xff]
        %v497 = vld [vmem:[#allocation2 + $0x70] sm:$0xff]
        %v498 = vld [vmem:[#allocation2 + $0x80] sm:$0xff]
        %v499 = vld [vmem:[#allocation2 + $0x90] sm:$0xff]
        %v500 = vld [vmem:[#allocation2 + $0xa0] sm:$0xff]
        %v501 = vld [vmem:[#allocation2 + $0xb0] sm:$0xff]
        %v502 = vld [vmem:[#allocation2 + $0xc0] sm:$0xff]
        %v503 = vld [vmem:[#allocation2 + $0xd0] sm:$0xff]
        %v504 = vld [vmem:[#allocation2 + $0xe0] sm:$0xff]
        %v505 = vld [vmem:[#allocation2 + $0xf0] sm:$0xff]
        %v506 = vld [vmem:[%s371] sm:$0xf]
        %v507 = vld [vmem:[%s371 + $0x4] sm:$0xf]
        %v508 = vld [vmem:[%s371 + $0x8] sm:$0xf]
        %v509 = vld [vmem:[%s371 + $0xc] sm:$0xf]
        %v510 = vld [vmem:[%s371 + $0x10] sm:$0xf]
        %v511 = vld [vmem:[%s371 + $0x14] sm:$0xf]
        %v512 = vld [vmem:[%s371 + $0x18] sm:$0xf]
        %v513 = vld [vmem:[%s371 + $0x1c] sm:$0xf]
        %v514 = vld [vmem:[%s371 + $0x20] sm:$0xf]
        %v515 = vld [vmem:[%s371 + $0x24] sm:$0xf]
        %v516 = vld [vmem:[%s371 + $0x28] sm:$0xf]
        %v517 = vld [vmem:[%s371 + $0x2c] sm:$0xf]
        %v518 = vld [vmem:[%s371 + $0x30] sm:$0xf]
        %v519 = vld [vmem:[%s371 + $0x34] sm:$0xf]
        %v520 = vld [vmem:[%s371 + $0x38] sm:$0xf]
        %v521 = vld [vmem:[%s371 + $0x3c] sm:$0xf]
        %v522 = vunpack.c.l.bf16 %v506
        %v523 = vunpack.c.l.bf16 %v507
        %v524 = vunpack.c.l.bf16 %v508
        %v525 = vunpack.c.l.bf16 %v509
        %v526 = vunpack.c.l.bf16 %v510
        %v527 = vunpack.c.l.bf16 %v511
        %v528 = vunpack.c.l.bf16 %v512
        %v529 = vunpack.c.l.bf16 %v513
        %v530 = vunpack.c.l.bf16 %v514
        %v531 = vunpack.c.l.bf16 %v515
        %v532 = vunpack.c.l.bf16 %v516
        %v533 = vunpack.c.l.bf16 %v517
        %v534 = vunpack.c.l.bf16 %v518
        %v535 = vunpack.c.l.bf16 %v519
        %v536 = vunpack.c.l.bf16 %v520
        %v537 = vunpack.c.l.bf16 %v521
        %v538 = vld [vmem:[%s418] sm:$0xff]
        %v539 = vld [vmem:[%s418 + $0x8] sm:$0xff]
        %v540 = vld [vmem:[%s418 + $0x10] sm:$0xff]
        %v541 = vld [vmem:[%s418 + $0x18] sm:$0xff]
        %v542 = vld [vmem:[%s418 + $0x20] sm:$0xff]
        %v543 = vld [vmem:[%s418 + $0x28] sm:$0xff]
        %v544 = vld [vmem:[%s418 + $0x30] sm:$0xff]
        %v545 = vld [vmem:[%s418 + $0x38] sm:$0xff]
        %v546 = vld [vmem:[%s418 + $0x40] sm:$0xff]
        %v547 = vld [vmem:[%s418 + $0x48] sm:$0xff]
        %v548 = vld [vmem:[%s418 + $0x50] sm:$0xff]
        %v549 = vld [vmem:[%s418 + $0x58] sm:$0xff]
        %v550 = vld [vmem:[%s418 + $0x60] sm:$0xff]
        %v551 = vld [vmem:[%s418 + $0x68] sm:$0xff]
        %v552 = vld [vmem:[%s418 + $0x70] sm:$0xff]
        %v553 = vld [vmem:[%s418 + $0x78] sm:$0xff]
        %554 = vmatprep.subr.mxu0 0.0
        %555 = vmatpush1.msra.mxu0 %v538
        %556 = vmatprep.subr.mxu0 0.0
        %557 = vmatpush1.msra.mxu0 %v539
        %558 = vmatprep.subr.mxu0 0.0
        %559 = vmatpush1.msra.mxu0 %v540
        %560 = vmatprep.subr.mxu0 0.0
        %561 = vmatpush1.msra.mxu0 %v541
        %562 = vmatprep.subr.mxu0 0.0
        %563 = vmatpush1.msra.mxu0 %v542
        %564 = vmatprep.subr.mxu0 0.0
        %565 = vmatpush1.msra.mxu0 %v543
        %566 = vmatprep.subr.mxu0 0.0
        %567 = vmatpush1.msra.mxu0 %v544
        %568 = vmatprep.subr.mxu0 0.0
        %569 = vmatpush1.msra.mxu0 %v545
        %570 = vmatprep.subr.mxu0 0.0
        %571 = vmatpush1.msra.mxu0 %v546
        %572 = vmatprep.subr.mxu0 0.0
        %573 = vmatpush1.msra.mxu0 %v547
        %574 = vmatprep.subr.mxu0 0.0
        %575 = vmatpush1.msra.mxu0 %v548
        %576 = vmatprep.subr.mxu0 0.0
        %577 = vmatpush1.msra.mxu0 %v549
        %578 = vmatprep.subr.mxu0 0.0
        %579 = vmatpush1.msra.mxu0 %v550
        %580 = vmatprep.subr.mxu0 0.0
        %581 = vmatpush1.msra.mxu0 %v551
        %582 = vmatprep.subr.mxu0 0.0
        %583 = vmatpush1.msra.mxu0 %v552
        %584 = vmatprep.subr.mxu0 0.0
        %585 = vmatpush1.msra.mxu0 %v553
        %586 = vmatprep.subr.mxu0 0.0
        %587 = vmatpush1.msra.mxu0 0.0
        %588 = vmatprep.subr.mxu0 0.0
        %589 = vmatpush1.msra.mxu0 0.0
        %590 = vmatprep.subr.mxu0 0.0
        %591 = vmatpush1.msra.mxu0 0.0
        %592 = vmatprep.subr.mxu0 0.0
        %593 = vmatpush1.msra.mxu0 0.0
        %594 = vmatprep.subr.mxu0 0.0
        %595 = vmatpush1.msra.mxu0 0.0
        %596 = vmatprep.subr.mxu0 0.0
        %597 = vmatpush1.msra.mxu0 0.0
        %598 = vmatprep.subr.mxu0 0.0
        %599 = vmatpush1.msra.mxu0 0.0
        %600 = vmatprep.subr.mxu0 0.0
        %601 = vmatpush1.msra.mxu0 0.0
        %602 = vmatprep.subr.mxu0 0.0
        %603 = vmatpush1.msra.mxu0 0.0
        %604 = vmatprep.subr.mxu0 0.0
        %605 = vmatpush1.msra.mxu0 0.0
        %606 = vmatprep.subr.mxu0 0.0
        %607 = vmatpush1.msra.mxu0 0.0
        %608 = vmatprep.subr.mxu0 0.0
        %609 = vmatpush1.msra.mxu0 0.0
        %610 = vmatprep.subr.mxu0 0.0
        %611 = vmatpush1.msra.mxu0 0.0
        %612 = vmatprep.subr.mxu0 0.0
        %613 = vmatpush1.msra.mxu0 0.0
        %614 = vmatprep.subr.mxu0 0.0
        %615 = vmatpush1.msra.mxu0 0.0
        %616 = vmatprep.subr.mxu0 0.0
        %617 = vmatpush1.msra.mxu0 0.0
        %618 = vmatprep.mubr.f32.mxu0 0.0
        %619 = vmatmul.mubr.f32.gmra.mrb[0].mxu0 %v522
        %v620 = vpop.f32.mrb[0].mxu0
        %v621 = vadd.f32 0.0, %v620
        %v622 = vpop.f32.mrb[0].mxu0
        %623 = vmatprep.mubr.f32.mxu0 0.0
        %624 = vmatmul.mubr.f32.gmra.mrb[0].mxu0 %v523
        %v625 = vpop.f32.mrb[0].mxu0
        %v626 = vadd.f32 0.0, %v625
        %v627 = vpop.f32.mrb[0].mxu0
        %628 = vmatprep.mubr.f32.mxu0 0.0
        %629 = vmatmul.mubr.f32.gmra.mrb[0].mxu0 %v524
        %v630 = vpop.f32.mrb[0].mxu0
        %v631 = vadd.f32 0.0, %v630
        %v632 = vpop.f32.mrb[0].mxu0
        %633 = vmatprep.mubr.f32.mxu0 0.0
        %634 = vmatmul.mubr.f32.gmra.mrb[0].mxu0 %v525
        %v635 = vpop.f32.mrb[0].mxu0
        %v636 = vadd.f32 0.0, %v635
        %v637 = vpop.f32.mrb[0].mxu0
        %638 = vmatprep.mubr.f32.mxu0 0.0
        %639 = vmatmul.mubr.f32.gmra.mrb[0].mxu0 %v526
        %v640 = vpop.f32.mrb[0].mxu0
        %v641 = vadd.f32 0.0, %v640
        %v642 = vpop.f32.mrb[0].mxu0
        %643 = vmatprep.mubr.f32.mxu0 0.0
        %644 = vmatmul.mubr.f32.gmra.mrb[0].mxu0 %v527
        %v645 = vpop.f32.mrb[0].mxu0
        %v646 = vadd.f32 0.0, %v645
        %v647 = vpop.f32.mrb[0].mxu0
        %648 = vmatprep.mubr.f32.mxu0 0.0
        %649 = vmatmul.mubr.f32.gmra.mrb[0].mxu0 %v528
        %v650 = vpop.f32.mrb[0].mxu0
        %v651 = vadd.f32 0.0, %v650
        %v652 = vpop.f32.mrb[0].mxu0
        %653 = vmatprep.mubr.f32.mxu0 0.0
        %654 = vmatmul.mubr.f32.gmra.mrb[0].mxu0 %v529
        %v655 = vpop.f32.mrb[0].mxu0
        %v656 = vadd.f32 0.0, %v655
        %v657 = vpop.f32.mrb[0].mxu0
        %658 = vmatprep.mubr.f32.mxu0 0.0
        %659 = vmatmul.mubr.f32.gmra.mrb[0].mxu0 %v530
        %v660 = vpop.f32.mrb[0].mxu0
        %v661 = vadd.f32 0.0, %v660
        %v662 = vpop.f32.mrb[0].mxu0
        %663 = vmatprep.mubr.f32.mxu0 0.0
        %664 = vmatmul.mubr.f32.gmra.mrb[0].mxu0 %v531
        %v665 = vpop.f32.mrb[0].mxu0
        %v666 = vadd.f32 0.0, %v665
        %v667 = vpop.f32.mrb[0].mxu0
        %668 = vmatprep.mubr.f32.mxu0 0.0
        %669 = vmatmul.mubr.f32.gmra.mrb[0].mxu0 %v532
        %v670 = vpop.f32.mrb[0].mxu0
        %v671 = vadd.f32 0.0, %v670
        %v672 = vpop.f32.mrb[0].mxu0
        %673 = vmatprep.mubr.f32.mxu0 0.0
        %674 = vmatmul.mubr.f32.gmra.mrb[0].mxu0 %v533
        %v675 = vpop.f32.mrb[0].mxu0
        %v676 = vadd.f32 0.0, %v675
        %v677 = vpop.f32.mrb[0].mxu0
        %678 = vmatprep.mubr.f32.mxu0 0.0
        %679 = vmatmul.mubr.f32.gmra.mrb[0].mxu0 %v534
        %v680 = vpop.f32.mrb[0].mxu0
        %v681 = vadd.f32 0.0, %v680
        %v682 = vpop.f32.mrb[0].mxu0
        %683 = vmatprep.mubr.f32.mxu0 0.0
        %684 = vmatmul.mubr.f32.gmra.mrb[0].mxu0 %v535
        %v685 = vpop.f32.mrb[0].mxu0
        %v686 = vadd.f32 0.0, %v685
        %v687 = vpop.f32.mrb[0].mxu0
        %688 = vmatprep.mubr.f32.mxu0 0.0
        %689 = vmatmul.mubr.f32.gmra.mrb[0].mxu0 %v536
        %v690 = vpop.f32.mrb[0].mxu0
        %v691 = vadd.f32 0.0, %v690
        %v692 = vpop.f32.mrb[0].mxu0
        %693 = vmatprep.mubr.f32.mxu0 0.0
        %694 = vmatmul.mubr.f32.gmra.mrb[0].mxu0 %v537
        %v695 = vpop.f32.mrb[0].mxu0
        %v696 = vadd.f32 0.0, %v695
        %v697 = vpop.f32.mrb[0].mxu0
        %698 = vdwg.mxu0
        %v699 = vadd.f32 %v490, %v621
        %v700 = vadd.f32 %v491, %v626
        %v701 = vadd.f32 %v492, %v631
        %v702 = vadd.f32 %v493, %v636
        %v703 = vadd.f32 %v494, %v641
        %v704 = vadd.f32 %v495, %v646
        %v705 = vadd.f32 %v496, %v651
        %v706 = vadd.f32 %v497, %v656
        %v707 = vadd.f32 %v498, %v661
        %v708 = vadd.f32 %v499, %v666
        %v709 = vadd.f32 %v500, %v671
        %v710 = vadd.f32 %v501, %v676
        %v711 = vadd.f32 %v502, %v681
        %v712 = vadd.f32 %v503, %v686
        %v713 = vadd.f32 %v504, %v691
        %v714 = vadd.f32 %v505, %v696
        %715 = vst [vmem:[#allocation2] sm:$0xff] %v699
        %716 = vst [vmem:[#allocation2 + $0x10] sm:$0xff] %v700
        %717 = vst [vmem:[#allocation2 + $0x20] sm:$0xff] %v701
        %718 = vst [vmem:[#allocation2 + $0x30] sm:$0xff] %v702
        %719 = vst [vmem:[#allocation2 + $0x40] sm:$0xff] %v703
        %720 = vst [vmem:[#allocation2 + $0x50] sm:$0xff] %v704
        %721 = vst [vmem:[#allocation2 + $0x60] sm:$0xff] %v705
        %722 = vst [vmem:[#allocation2 + $0x70] sm:$0xff] %v706
        %723 = vst [vmem:[#allocation2 + $0x80] sm:$0xff] %v707
        %724 = vst [vmem:[#allocation2 + $0x90] sm:$0xff] %v708
        %725 = vst [vmem:[#allocation2 + $0xa0] sm:$0xff] %v709
        %726 = vst [vmem:[#allocation2 + $0xb0] sm:$0xff] %v710
        %727 = vst [vmem:[#allocation2 + $0xc0] sm:$0xff] %v711
        %728 = vst [vmem:[#allocation2 + $0xd0] sm:$0xff] %v712
        %729 = vst [vmem:[#allocation2 + $0xe0] sm:$0xff] %v713
        %730 = vst [vmem:[#allocation2 + $0xf0] sm:$0xff] %v714
        %p731 = scmp.eq.s32.totalorder %s22, 2
        // Predicated region
        $region90: #{gs_forward.3} parent=80 // pred_check
          %p732 = pneg %p731
        $region91: #{gs_forward.3} parent=80 // pred_check_branch
          %734 = sbr.rel (%p732) target = $region93
        $region92: #{gs_forward.3} parent=80 // pred_region
          %v735 = vld [vmem:[#allocation2] sm:$0xff]
          %v736 = vld [vmem:[#allocation2 + $0x10] sm:$0xff]
          %v737 = vld [vmem:[#allocation2 + $0x20] sm:$0xff]
          %v738 = vld [vmem:[#allocation2 + $0x30] sm:$0xff]
          %v739 = vld [vmem:[#allocation2 + $0x40] sm:$0xff]
          %v740 = vld [vmem:[#allocation2 + $0x50] sm:$0xff]
          %v741 = vld [vmem:[#allocation2 + $0x60] sm:$0xff]
          %v742 = vld [vmem:[#allocation2 + $0x70] sm:$0xff]
          %v743 = vld [vmem:[#allocation2 + $0x80] sm:$0xff]
          %v744 = vld [vmem:[#allocation2 + $0x90] sm:$0xff]
          %v745 = vld [vmem:[#allocation2 + $0xa0] sm:$0xff]
          %v746 = vld [vmem:[#allocation2 + $0xb0] sm:$0xff]
          %v747 = vld [vmem:[#allocation2 + $0xc0] sm:$0xff]
          %v748 = vld [vmem:[#allocation2 + $0xd0] sm:$0xff]
          %v749 = vld [vmem:[#allocation2 + $0xe0] sm:$0xff]
          %v750 = vld [vmem:[#allocation2 + $0xf0] sm:$0xff]
          %v751 = vld [vmem:[%s430] sm:$0xff]
          %v752 = vld [vmem:[%s430 + $0x8] sm:$0xff]
          %v753 = vld [vmem:[%s430 + $0x10] sm:$0xff]
          %v754 = vld [vmem:[%s430 + $0x18] sm:$0xff]
          %v755 = vld [vmem:[%s430 + $0x20] sm:$0xff]
          %v756 = vld [vmem:[%s430 + $0x28] sm:$0xff]
          %v757 = vld [vmem:[%s430 + $0x30] sm:$0xff]
          %v758 = vld [vmem:[%s430 + $0x38] sm:$0xff]
          %v759 = vld [vmem:[%s430 + $0x40] sm:$0xff]
          %v760 = vld [vmem:[%s430 + $0x48] sm:$0xff]
          %v761 = vld [vmem:[%s430 + $0x50] sm:$0xff]
          %v762 = vld [vmem:[%s430 + $0x58] sm:$0xff]
          %v763 = vld [vmem:[%s430 + $0x60] sm:$0xff]
          %v764 = vld [vmem:[%s430 + $0x68] sm:$0xff]
          %v765 = vld [vmem:[%s430 + $0x70] sm:$0xff]
          %v766 = vld [vmem:[%s430 + $0x78] sm:$0xff]
          %768 = vset.pattern.permute.xlu0 0
          %769 = vperm.xlu0 %768, %v751
          %v770 = vpop.permute.xlu0 %769
          %773 = vset.pattern.permute.xlu0 0
          %774 = vperm.xlu0 %773, %v752
          %v775 = vpop.permute.xlu0 %774
          %778 = vset.pattern.permute.xlu0 0
          %779 = vperm.xlu0 %778, %v753
          %v780 = vpop.permute.xlu0 %779
          %783 = vset.pattern.permute.xlu0 0
          %784 = vperm.xlu0 %783, %v754
          %v785 = vpop.permute.xlu0 %784
          %788 = vset.pattern.permute.xlu0 0
          %789 = vperm.xlu0 %788, %v755
          %v790 = vpop.permute.xlu0 %789
          %793 = vset.pattern.permute.xlu0 0
          %794 = vperm.xlu0 %793, %v756
          %v795 = vpop.permute.xlu0 %794
          %798 = vset.pattern.permute.xlu0 0
          %799 = vperm.xlu0 %798, %v757
          %v800 = vpop.permute.xlu0 %799
          %803 = vset.pattern.permute.xlu0 0
          %804 = vperm.xlu0 %803, %v758
          %v805 = vpop.permute.xlu0 %804
          %808 = vset.pattern.permute.xlu0 0
          %809 = vperm.xlu0 %808, %v759
          %v810 = vpop.permute.xlu0 %809
          %813 = vset.pattern.permute.xlu0 0
          %814 = vperm.xlu0 %813, %v760
          %v815 = vpop.permute.xlu0 %814
          %818 = vset.pattern.permute.xlu0 0
          %819 = vperm.xlu0 %818, %v761
          %v820 = vpop.permute.xlu0 %819
          %823 = vset.pattern.permute.xlu0 0
          %824 = vperm.xlu0 %823, %v762
          %v825 = vpop.permute.xlu0 %824
          %828 = vset.pattern.permute.xlu0 0
          %829 = vperm.xlu0 %828, %v763
          %v830 = vpop.permute.xlu0 %829
          %833 = vset.pattern.permute.xlu0 0
          %834 = vperm.xlu0 %833, %v764
          %v835 = vpop.permute.xlu0 %834
          %838 = vset.pattern.permute.xlu0 0
          %839 = vperm.xlu0 %838, %v765
          %v840 = vpop.permute.xlu0 %839
          %843 = vset.pattern.permute.xlu0 0
          %844 = vperm.xlu0 %843, %v766
          %v845 = vpop.permute.xlu0 %844
          %v847 = vmul.f32 %v735, %v770
          %v848 = vmul.f32 %v736, %v775
          %v849 = vmul.f32 %v737, %v780
          %v850 = vmul.f32 %v738, %v785
          %v851 = vmul.f32 %v739, %v790
          %v852 = vmul.f32 %v740, %v795
          %v853 = vmul.f32 %v741, %v800
          %v854 = vmul.f32 %v742, %v805
          %v855 = vmul.f32 %v743, %v810
          %v856 = vmul.f32 %v744, %v815
          %v857 = vmul.f32 %v745, %v820
          %v858 = vmul.f32 %v746, %v825
          %v859 = vmul.f32 %v747, %v830
          %v860 = vmul.f32 %v748, %v835
          %v861 = vmul.f32 %v749, %v840
          %v862 = vmul.f32 %v750, %v845
          %863 = vst [vmem:[#allocation2] sm:$0xff] %v847
          %864 = vst [vmem:[#allocation2 + $0x10] sm:$0xff] %v848
          %865 = vst [vmem:[#allocation2 + $0x20] sm:$0xff] %v849
          %866 = vst [vmem:[#allocation2 + $0x30] sm:$0xff] %v850
          %867 = vst [vmem:[#allocation2 + $0x40] sm:$0xff] %v851
          %868 = vst [vmem:[#allocation2 + $0x50] sm:$0xff] %v852
          %869 = vst [vmem:[#allocation2 + $0x60] sm:$0xff] %v853
          %870 = vst [vmem:[#allocation2 + $0x70] sm:$0xff] %v854
          %871 = vst [vmem:[#allocation2 + $0x80] sm:$0xff] %v855
          %872 = vst [vmem:[#allocation2 + $0x90] sm:$0xff] %v856
          %873 = vst [vmem:[#allocation2 + $0xa0] sm:$0xff] %v857
          %874 = vst [vmem:[#allocation2 + $0xb0] sm:$0xff] %v858
          %875 = vst [vmem:[#allocation2 + $0xc0] sm:$0xff] %v859
          %876 = vst [vmem:[#allocation2 + $0xd0] sm:$0xff] %v860
          %877 = vst [vmem:[#allocation2 + $0xe0] sm:$0xff] %v861
          %878 = vst [vmem:[#allocation2 + $0xf0] sm:$0xff] %v862
          %v879 = vld [vmem:[#allocation2] sm:$0xff]
          %v880 = vld [vmem:[#allocation2 + $0x8] sm:$0xff]
          %v881 = vld [vmem:[#allocation2 + $0x10] sm:$0xff]
          %v882 = vld [vmem:[#allocation2 + $0x18] sm:$0xff]
          %v883 = vld [vmem:[#allocation2 + $0x20] sm:$0xff]
          %v884 = vld [vmem:[#allocation2 + $0x28] sm:$0xff]
          %v885 = vld [vmem:[#allocation2 + $0x30] sm:$0xff]
          %v886 = vld [vmem:[#allocation2 + $0x38] sm:$0xff]
          %v887 = vld [vmem:[#allocation2 + $0x40] sm:$0xff]
          %v888 = vld [vmem:[#allocation2 + $0x48] sm:$0xff]
          %v889 = vld [vmem:[#allocation2 + $0x50] sm:$0xff]
          %v890 = vld [vmem:[#allocation2 + $0x58] sm:$0xff]
          %v891 = vld [vmem:[#allocation2 + $0x60] sm:$0xff]
          %v892 = vld [vmem:[#allocation2 + $0x68] sm:$0xff]
          %v893 = vld [vmem:[#allocation2 + $0x70] sm:$0xff]
          %v894 = vld [vmem:[#allocation2 + $0x78] sm:$0xff]
          %v895 = vld [vmem:[#allocation2 + $0x80] sm:$0xff]
          %v896 = vld [vmem:[#allocation2 + $0x88] sm:$0xff]
          %v897 = vld [vmem:[#allocation2 + $0x90] sm:$0xff]
          %v898 = vld [vmem:[#allocation2 + $0x98] sm:$0xff]
          %v899 = vld [vmem:[#allocation2 + $0xa0] sm:$0xff]
          %v900 = vld [vmem:[#allocation2 + $0xa8] sm:$0xff]
          %v901 = vld [vmem:[#allocation2 + $0xb0] sm:$0xff]
          %v902 = vld [vmem:[#allocation2 + $0xb8] sm:$0xff]
          %v903 = vld [vmem:[#allocation2 + $0xc0] sm:$0xff]
          %v904 = vld [vmem:[#allocation2 + $0xc8] sm:$0xff]
          %v905 = vld [vmem:[#allocation2 + $0xd0] sm:$0xff]
          %v906 = vld [vmem:[#allocation2 + $0xd8] sm:$0xff]
          %v907 = vld [vmem:[#allocation2 + $0xe0] sm:$0xff]
          %v908 = vld [vmem:[#allocation2 + $0xe8] sm:$0xff]
          %v909 = vld [vmem:[#allocation2 + $0xf0] sm:$0xff]
          %v910 = vld [vmem:[#allocation2 + $0xf8] sm:$0xff]
          %v911 = vld [vmem:[%s4] sm:$0xff]
          %v912 = vld [vmem:[%s4 + $0x8] sm:$0xff]
          %v913 = vld [vmem:[%s4 + $0x10] sm:$0xff]
          %v914 = vld [vmem:[%s4 + $0x18] sm:$0xff]
          %v915 = vld [vmem:[%s4 + $0x20] sm:$0xff]
          %v916 = vld [vmem:[%s4 + $0x28] sm:$0xff]
          %v917 = vld [vmem:[%s4 + $0x30] sm:$0xff]
          %v918 = vld [vmem:[%s4 + $0x38] sm:$0xff]
          %v919 = vld [vmem:[%s4 + $0x40] sm:$0xff]
          %v920 = vld [vmem:[%s4 + $0x48] sm:$0xff]
          %v921 = vld [vmem:[%s4 + $0x50] sm:$0xff]
          %v922 = vld [vmem:[%s4 + $0x58] sm:$0xff]
          %v923 = vld [vmem:[%s4 + $0x60] sm:$0xff]
          %v924 = vld [vmem:[%s4 + $0x68] sm:$0xff]
          %v925 = vld [vmem:[%s4 + $0x70] sm:$0xff]
          %v926 = vld [vmem:[%s4 + $0x78] sm:$0xff]
          %v927 = vld [vmem:[%s4 + $0x80] sm:$0xff]
          %v928 = vld [vmem:[%s4 + $0x88] sm:$0xff]
          %v929 = vld [vmem:[%s4 + $0x90] sm:$0xff]
          %v930 = vld [vmem:[%s4 + $0x98] sm:$0xff]
          %v931 = vld [vmem:[%s4 + $0xa0] sm:$0xff]
          %v932 = vld [vmem:[%s4 + $0xa8] sm:$0xff]
          %v933 = vld [vmem:[%s4 + $0xb0] sm:$0xff]
          %v934 = vld [vmem:[%s4 + $0xb8] sm:$0xff]
          %v935 = vld [vmem:[%s4 + $0xc0] sm:$0xff]
          %v936 = vld [vmem:[%s4 + $0xc8] sm:$0xff]
          %v937 = vld [vmem:[%s4 + $0xd0] sm:$0xff]
          %v938 = vld [vmem:[%s4 + $0xd8] sm:$0xff]
          %v939 = vld [vmem:[%s4 + $0xe0] sm:$0xff]
          %v940 = vld [vmem:[%s4 + $0xe8] sm:$0xff]
          %v941 = vld [vmem:[%s4 + $0xf0] sm:$0xff]
          %v942 = vld [vmem:[%s4 + $0xf8] sm:$0xff]
          %v943 = vld [vmem:[%s5] sm:$0x1]
          %v945 = vlaneseq
          %v946 = vshrl.u32 %v945, 7
          %v947 = vsub.s32 0, %v946
          %v948 = vrot.slane %v943, %v947
          %950 = vmatprep.subr.mxu0 0.0
          %951 = vmatpush1.msra.mxu0 %v911
          %952 = vmatprep.subr.mxu0 0.0
          %953 = vmatpush1.msra.mxu0 %v912
          %954 = vmatprep.subr.mxu0 0.0
          %955 = vmatpush1.msra.mxu0 %v913
          %956 = vmatprep.subr.mxu0 0.0
          %957 = vmatpush1.msra.mxu0 %v914
          %958 = vmatprep.subr.mxu0 0.0
          %959 = vmatpush1.msra.mxu0 %v915
          %960 = vmatprep.subr.mxu0 0.0
          %961 = vmatpush1.msra.mxu0 %v916
          %962 = vmatprep.subr.mxu0 0.0
          %963 = vmatpush1.msra.mxu0 %v917
          %964 = vmatprep.subr.mxu0 0.0
          %965 = vmatpush1.msra.mxu0 %v918
          %966 = vmatprep.subr.mxu0 0.0
          %967 = vmatpush1.msra.mxu0 %v919
          %968 = vmatprep.subr.mxu0 0.0
          %969 = vmatpush1.msra.mxu0 %v920
          %970 = vmatprep.subr.mxu0 0.0
          %971 = vmatpush1.msra.mxu0 %v921
          %972 = vmatprep.subr.mxu0 0.0
          %973 = vmatpush1.msra.mxu0 %v922
          %974 = vmatprep.subr.mxu0 0.0
          %975 = vmatpush1.msra.mxu0 %v923
          %976 = vmatprep.subr.mxu0 0.0
          %977 = vmatpush1.msra.mxu0 %v924
          %978 = vmatprep.subr.mxu0 0.0
          %979 = vmatpush1.msra.mxu0 %v925
          %980 = vmatprep.subr.mxu0 0.0
          %981 = vmatpush1.msra.mxu0 %v926
          %982 = vmatprep.subr.mxu0 0.0
          %983 = vmatpush1.msra.mxu0 %v927
          %984 = vmatprep.subr.mxu0 0.0
          %985 = vmatpush1.msra.mxu0 %v928
          %986 = vmatprep.subr.mxu0 0.0
          %987 = vmatpush1.msra.mxu0 %v929
          %988 = vmatprep.subr.mxu0 0.0
          %989 = vmatpush1.msra.mxu0 %v930
          %990 = vmatprep.subr.mxu0 0.0
          %991 = vmatpush1.msra.mxu0 %v931
          %992 = vmatprep.subr.mxu0 0.0
          %993 = vmatpush1.msra.mxu0 %v932
          %994 = vmatprep.subr.mxu0 0.0
          %995 = vmatpush1.msra.mxu0 %v933
          %996 = vmatprep.subr.mxu0 0.0
          %997 = vmatpush1.msra.mxu0 %v934
          %998 = vmatprep.subr.mxu0 0.0
          %999 = vmatpush1.msra.mxu0 %v935
          %1000 = vmatprep.subr.mxu0 0.0
          %1001 = vmatpush1.msra.mxu0 %v936
          %1002 = vmatprep.subr.mxu0 0.0
          %1003 = vmatpush1.msra.mxu0 %v937
          %1004 = vmatprep.subr.mxu0 0.0
          %1005 = vmatpush1.msra.mxu0 %v938
          %1006 = vmatprep.subr.mxu0 0.0
          %1007 = vmatpush1.msra.mxu0 %v939
          %1008 = vmatprep.subr.mxu0 0.0
          %1009 = vmatpush1.msra.mxu0 %v940
          %1010 = vmatprep.subr.mxu0 0.0
          %1011 = vmatpush1.msra.mxu0 %v941
          %1012 = vmatprep.subr.mxu0 0.0
          %1013 = vmatpush1.msra.mxu0 %v942
          %1014 = vmatprep.mubr.f32.mxu0 %v880
          %1015 = vmatmul.mubr.f32.gmra.mrb[0].mxu0 %v879
          %v1016 = vpop.f32.mrb[0].mxu0
          %v1017 = vadd.f32 %v948, %v1016
          %v1018 = vpop.f32.mrb[0].mxu0
          %1019 = vmatprep.mubr.f32.mxu0 %v882
          %1020 = vmatmul.mubr.f32.gmra.mrb[0].mxu0 %v881
          %v1021 = vpop.f32.mrb[0].mxu0
          %v1022 = vadd.f32 %v948, %v1021
          %v1023 = vpop.f32.mrb[0].mxu0
          %1024 = vmatprep.mubr.f32.mxu0 %v884
          %1025 = vmatmul.mubr.f32.gmra.mrb[0].mxu0 %v883
          %v1026 = vpop.f32.mrb[0].mxu0
          %v1027 = vadd.f32 %v948, %v1026
          %v1028 = vpop.f32.mrb[0].mxu0
          %1029 = vmatprep.mubr.f32.mxu0 %v886
          %1030 = vmatmul.mubr.f32.gmra.mrb[0].mxu0 %v885
          %v1031 = vpop.f32.mrb[0].mxu0
          %v1032 = vadd.f32 %v948, %v1031
          %v1033 = vpop.f32.mrb[0].mxu0
          %1034 = vmatprep.mubr.f32.mxu0 %v888
          %1035 = vmatmul.mubr.f32.gmra.mrb[0].mxu0 %v887
          %v1036 = vpop.f32.mrb[0].mxu0
          %v1037 = vadd.f32 %v948, %v1036
          %v1038 = vpop.f32.mrb[0].mxu0
          %1039 = vmatprep.mubr.f32.mxu0 %v890
          %1040 = vmatmul.mubr.f32.gmra.mrb[0].mxu0 %v889
          %v1041 = vpop.f32.mrb[0].mxu0
          %v1042 = vadd.f32 %v948, %v1041
          %v1043 = vpop.f32.mrb[0].mxu0
          %1044 = vmatprep.mubr.f32.mxu0 %v892
          %1045 = vmatmul.mubr.f32.gmra.mrb[0].mxu0 %v891
          %v1046 = vpop.f32.mrb[0].mxu0
          %v1047 = vadd.f32 %v948, %v1046
          %v1048 = vpop.f32.mrb[0].mxu0
          %1049 = vmatprep.mubr.f32.mxu0 %v894
          %1050 = vmatmul.mubr.f32.gmra.mrb[0].mxu0 %v893
          %v1051 = vpop.f32.mrb[0].mxu0
          %v1052 = vadd.f32 %v948, %v1051
          %v1053 = vpop.f32.mrb[0].mxu0
          %1054 = vmatprep.mubr.f32.mxu0 %v896
          %1055 = vmatmul.mubr.f32.gmra.mrb[0].mxu0 %v895
          %v1056 = vpop.f32.mrb[0].mxu0
          %v1057 = vadd.f32 %v948, %v1056
          %v1058 = vpop.f32.mrb[0].mxu0
          %1059 = vmatprep.mubr.f32.mxu0 %v898
          %1060 = vmatmul.mubr.f32.gmra.mrb[0].mxu0 %v897
          %v1061 = vpop.f32.mrb[0].mxu0
          %v1062 = vadd.f32 %v948, %v1061
          %v1063 = vpop.f32.mrb[0].mxu0
          %1064 = vmatprep.mubr.f32.mxu0 %v900
          %1065 = vmatmul.mubr.f32.gmra.mrb[0].mxu0 %v899
          %v1066 = vpop.f32.mrb[0].mxu0
          %v1067 = vadd.f32 %v948, %v1066
          %v1068 = vpop.f32.mrb[0].mxu0
          %1069 = vmatprep.mubr.f32.mxu0 %v902
          %1070 = vmatmul.mubr.f32.gmra.mrb[0].mxu0 %v901
          %v1071 = vpop.f32.mrb[0].mxu0
          %v1072 = vadd.f32 %v948, %v1071
          %v1073 = vpop.f32.mrb[0].mxu0
          %1074 = vmatprep.mubr.f32.mxu0 %v904
          %1075 = vmatmul.mubr.f32.gmra.mrb[0].mxu0 %v903
          %v1076 = vpop.f32.mrb[0].mxu0
          %v1077 = vadd.f32 %v948, %v1076
          %v1078 = vpop.f32.mrb[0].mxu0
          %1079 = vmatprep.mubr.f32.mxu0 %v906
          %1080 = vmatmul.mubr.f32.gmra.mrb[0].mxu0 %v905
          %v1081 = vpop.f32.mrb[0].mxu0
          %v1082 = vadd.f32 %v948, %v1081
          %v1083 = vpop.f32.mrb[0].mxu0
          %1084 = vmatprep.mubr.f32.mxu0 %v908
          %1085 = vmatmul.mubr.f32.gmra.mrb[0].mxu0 %v907
          %v1086 = vpop.f32.mrb[0].mxu0
          %v1087 = vadd.f32 %v948, %v1086
          %v1088 = vpop.f32.mrb[0].mxu0
          %1089 = vmatprep.mubr.f32.mxu0 %v910
          %1090 = vmatmul.mubr.f32.gmra.mrb[0].mxu0 %v909
          %v1091 = vpop.f32.mrb[0].mxu0
          %v1092 = vadd.f32 %v948, %v1091
          %v1093 = vpop.f32.mrb[0].mxu0
          %1094 = vdwg.mxu0
          %1095 = vst [vmem:[%s436] sm:$0xff] %v1017
          %1096 = vst [vmem:[%s436 + $0x8] sm:$0xff] %v1022
          %1097 = vst [vmem:[%s436 + $0x10] sm:$0xff] %v1027
          %1098 = vst [vmem:[%s436 + $0x18] sm:$0xff] %v1032
          %1099 = vst [vmem:[%s436 + $0x20] sm:$0xff] %v1037
          %1100 = vst [vmem:[%s436 + $0x28] sm:$0xff] %v1042
          %1101 = vst [vmem:[%s436 + $0x30] sm:$0xff] %v1047
          %1102 = vst [vmem:[%s436 + $0x38] sm:$0xff] %v1052
          %1103 = vst [vmem:[%s436 + $0x40] sm:$0xff] %v1057
          %1104 = vst [vmem:[%s436 + $0x48] sm:$0xff] %v1062
          %1105 = vst [vmem:[%s436 + $0x50] sm:$0xff] %v1067
          %1106 = vst [vmem:[%s436 + $0x58] sm:$0xff] %v1072
          %1107 = vst [vmem:[%s436 + $0x60] sm:$0xff] %v1077
          %1108 = vst [vmem:[%s436 + $0x68] sm:$0xff] %v1082
          %1109 = vst [vmem:[%s436 + $0x70] sm:$0xff] %v1087
          %1110 = vst [vmem:[%s436 + $0x78] sm:$0xff] %v1092
        $region93: #{gs_forward.3} parent=80 // pred_fallthru
          _
        %s1111 = smul.u32 16, %s21
        %p1112 = scmp.lt.s32.totalorder %s1111, 47
        %s1113 = scalar_select %p1112, %s1111, 47
        %s1114 = smul.addr %s1113, 8
        %s1115 = scalar_lea.vmem %s6, %s1114
        // Predicated region
        $region94: #{gs_forward.3} parent=80 // pred_check
          %p1116 = pneg %p195
        $region95: #{gs_forward.3} parent=80 // pred_check_branch
          %1118 = sbr.rel (%p1116) target = $region97
        $region96: #{gs_forward.3} parent=80 // pred_region
          %s1119 = smul.u32 16, %s21
        $region97: #{gs_forward.3} parent=80 // pred_fallthru
          _
      $region81: #{gs_forward.3} parent=5 // pred_fallthru
        _
      %p1120 = scmp.le.s32.totalorder 2, %s12
      // Predicated region
      $region98: #{gs_forward.3} parent=5 // pred_check
        %p1121 = pneg %p1120
      $region99: #{gs_forward.3} parent=5 // pred_check_branch
        %1123 = sbr.rel (%p1121) target = $region101
      $region100: #{gs_forward.3} parent=5 // pred_region
        %s1124 = ssub.s32 %s12, 2
        // Predicated region
        $region102: #{gs_forward.3} parent=100 // pred_check
          %p1125 = pneg %p201
        $region103: #{gs_forward.3} parent=100 // pred_check_branch
          %1127 = sbr.rel (%p1125) target = $region105
        $region104: #{gs_forward.3} parent=100 // pred_region
          %s1128 = smul.u32 16, %s23
          %p1129 = scmp.lt.s32.totalorder %s1128, 47
          %s1130 = scalar_select %p1129, %s1128, 47
          %s1131 = smul.addr %s1130, 8
          %s1132 = scalar_lea.vmem %s6, %s1131
        $region105: #{gs_forward.3} parent=100 // pred_fallthru
          _
      $region101: #{gs_forward.3} parent=5 // pred_fallthru
        _
    $region6: #{gs_forward.3} parent=1 // loop_footer
      %s16 = sadd.s32 1, %s12
    $region7: #{gs_forward.3} parent=1 // loop_footer_branch
      %11 = sbr.rel target = $region3
    $region8: #{gs_forward.3} parent=1 // loop_exit
      _

</llo_original>
